<compile_context>
chip_gen: v6e
topology: v6e:2x2x1
jax: 0.10.0
libtpu: 0.0.40
codegen_flags: <defaults>
</compile_context>

<pallas_src>
import jax
import jax.numpy as jnp
from jax.experimental import pallas as pl
from jax.experimental.pallas import tpu as pltpu
import numpy as np

INPUT_SIZE = 1
HIDDEN_DIM = 10
PADDED_H = 128   # one full lane group per gate


def _lstm_kernel(x_ref, wih_ref, whh_ref, b_ref, fcw_ref, fcb_ref, out_ref):
    """Single invocation: whole sequence in VMEM, static unrolled time loop.

    x_ref:   (B, T, 1)   f32 input sequence (batch_first, I == 1)
    wih_ref: (1, 4*HP)   input->gate row (g-gate columns pre-scaled by 2)
    whh_ref: (HP, 4*HP)  recurrent weights, zero-padded (g columns pre-scaled by 2)
    b_ref:   (1, 4*HP)   fused bias b_ih + b_hh, padded (g segment pre-scaled by 2)
    fcw_ref: (1, HP)     fc weight row, zero-padded
    fcb_ref: (1, 1)      fc bias
    out_ref: (B, 1)
    """
    B, T, _ = x_ref.shape
    HP = whh_ref.shape[0]

    whh = whh_ref[...]                                            # (HP, 4HP)

    # Hoisted input projection: I == 1 so x_t @ W_ih is an outer product; compute it
    # for every timestep at once on the VPU with the bias fused in.
    gx_all = (x_ref[...] * wih_ref[...][None, :, :]
              + b_ref[...][None, :, :])                           # (B, T, 4HP)

    h = jnp.zeros((B, HP), jnp.float32)
    c = jnp.zeros((B, HP), jnp.float32)

    # T is small and static -> fully unrolled; only h @ W_hh is on the serial chain.
    for t in range(T):
        gates = gx_all[:, t, :] + jnp.dot(h, whh,
                                          preferred_element_type=jnp.float32)
        s = jax.nn.sigmoid(gates)                                 # one EUP pass, all gates
        i_g = s[:, 0 * HP:1 * HP]                                 # lane-aligned slices
        f_g = s[:, 1 * HP:2 * HP]
        g_g = 2.0 * s[:, 2 * HP:3 * HP] - 1.0                     # tanh(x) = 2*sigmoid(2x)-1
        o_g = s[:, 3 * HP:4 * HP]
        c = f_g * c + i_g * g_g
        h = o_g * jnp.tanh(c)

    # Tail FC (H -> 1): VPU multiply + lane reduce (no MXU push, no masked gate math).
    out_ref[...] = (jnp.sum(h * fcw_ref[...], axis=-1, keepdims=True)
                    + fcb_ref[...])


@jax.jit
def lstm_model_forward(x, prepped):
    """x: (B, T, 1) float32, batch_first like the PyTorch module.
    prepped: output of prepare_params (computed once at parameter-load time)."""
    B, T, I = x.shape
    assert I == INPUT_SIZE
    # NOTE(v7x): with a real batch size, add a leading "parallel" batch grid axis so
    # both TensorCores are used; at B=2 a single invocation is optimal.
    return pl.pallas_call(
        _lstm_kernel,
        out_shape=jax.ShapeDtypeStruct((B, 1), jnp.float32),
        in_specs=[pl.BlockSpec(memory_space=pltpu.MemorySpace.VMEM)] * 6,
        out_specs=pl.BlockSpec(memory_space=pltpu.MemorySpace.VMEM),
    )(x.astype(jnp.float32), prepped["wih"], prepped["whh"], prepped["b"],
      prepped["fcw"], prepped["fcb"])


def prepare_params(params):
    """One-time weight prep: transpose, fuse biases, pre-scale the g gate by 2
    (tanh-via-sigmoid trick), and zero-pad every gate block to PADDED_H lanes."""
    H, HP = HIDDEN_DIM, PADDED_H
    w_ih = params["w_ih"].astype(jnp.float32)          # (4H, 1)
    w_hh = params["w_hh"].astype(jnp.float32)          # (4H, H)
    bias = (params["b_ih"] + params["b_hh"]).astype(jnp.float32)  # (4H,)
    fc_w = params["fc_w"].astype(jnp.float32)          # (1, H)
    fc_b = params["fc_b"].astype(jnp.float32)          # (1,)

    # scale the g-gate block (index 2 in PyTorch's [i, f, g, o] order) by 2
    scale = jnp.concatenate([jnp.ones((2 * H,), jnp.float32),
                             jnp.full((H,), 2.0, jnp.float32),
                             jnp.ones((H,), jnp.float32)])        # (4H,)

    wih_row = w_ih[:, 0] * scale                        # (4H,)
    whh_t = w_hh.T * scale[None, :]                     # (H, 4H)
    bias_s = bias * scale                               # (4H,)

    def pad_gate_row(v):                                # (4H,) -> (4*HP,)
        return jnp.pad(v.reshape(4, H), ((0, 0), (0, HP - H))).reshape(4 * HP)

    wih_pad = pad_gate_row(wih_row)[None, :]                        # (1, 4HP)
    b_pad = pad_gate_row(bias_s)[None, :]                           # (1, 4HP)
    whh_pad = jnp.pad(whh_t.reshape(H, 4, H),
                      ((0, HP - H), (0, 0), (0, HP - H))).reshape(HP, 4 * HP)
    fcw_pad = jnp.pad(fc_w, ((0, 0), (0, HP - H)))                  # (1, HP)
    fcb = fc_b.reshape(1, 1)

    return {"wih": wih_pad, "whh": whh_pad, "b": b_pad,
            "fcw": fcw_pad, "fcb": fcb}


def lstm_model_ref(x, params):
    """Pure-JAX reference matching torch.nn.LSTM semantics (gate order i, f, g, o)."""
    w_ih, w_hh, b_ih, b_hh, fc_w, fc_b = (
        params["w_ih"], params["w_hh"], params["b_ih"], params["b_hh"],
        params["fc_w"], params["fc_b"])
    B, T, I = x.shape
    H = w_hh.shape[1]
    h = jnp.zeros((B, H), jnp.float32)
    c = jnp.zeros((B, H), jnp.float32)

    def step(carry, x_t):
        h, c = carry
        gates = x_t @ w_ih.T + h @ w_hh.T + b_ih + b_hh
        i = jax.nn.sigmoid(gates[:, 0 * H:1 * H])
        f = jax.nn.sigmoid(gates[:, 1 * H:2 * H])
        g = jnp.tanh(gates[:, 2 * H:3 * H])
        o = jax.nn.sigmoid(gates[:, 3 * H:4 * H])
        c = f * c + i * g
        h = o * jnp.tanh(c)
        return (h, c), None

    (h, c), _ = jax.lax.scan(step, (h, c), jnp.transpose(x, (1, 0, 2)))
    return h @ fc_w.T + fc_b


def init_params(key, input_size, hidden_dim):
    """Deterministic uniform(-k, k) init matching PyTorch's default, k = 1/sqrt(H)."""
    k = 1.0 / np.sqrt(hidden_dim)
    ks = jax.random.split(key, 6)
    u = lambda kk, shape: jax.random.uniform(kk, shape, jnp.float32, -k, k)
    return {
        "w_ih": u(ks[0], (4 * hidden_dim, input_size)),
        "w_hh": u(ks[1], (4 * hidden_dim, hidden_dim)),
        "b_ih": u(ks[2], (4 * hidden_dim,)),
        "b_hh": u(ks[3], (4 * hidden_dim,)),
        "fc_w": u(ks[4], (1, hidden_dim)),
        "fc_b": u(ks[5], (1,)),
    }


if __name__ == "__main__":
    key = jax.random.PRNGKey(0)
    pkey, xkey = jax.random.split(key)

    B, T = 2, 8
    params = init_params(pkey, INPUT_SIZE, HIDDEN_DIM)
    prepped = prepare_params(params)           # one-time, parameter-load-time prep
    x = jax.random.normal(xkey, (B, T, INPUT_SIZE), jnp.float32)

    out = jax.block_until_ready(lstm_model_forward(x, prepped))
    ref = jax.block_until_ready(lstm_model_ref(x, params))

    assert out.shape == (B, 1)
    np.testing.assert_allclose(np.asarray(out), np.asarray(ref),
                               rtol=2e-5, atol=2e-5)
    print("KERNEL_OK")
</pallas_src>

<mosaic_0001>
module attributes {stable_mosaic.version = 11 : i64} {
  func.func @_lstm_kernel(%arg0: memref<2x8x1xf32, #tpu.memory_space<vmem>>, %arg1: memref<1x512xf32, #tpu.memory_space<vmem>>, %arg2: memref<128x512xf32, #tpu.memory_space<vmem>>, %arg3: memref<1x512xf32, #tpu.memory_space<vmem>>, %arg4: memref<1x128xf32, #tpu.memory_space<vmem>>, %arg5: memref<1x1xf32, #tpu.memory_space<vmem>>, %arg6: memref<2x1xf32, #tpu.memory_space<vmem>>) attributes {dimension_semantics = [], scalar_prefetch = 0 : i64, scratch_operands = 0 : i64, tpu.core_type = #tpu.core_type<tc>} {
    %c0 = arith.constant 0 : index
    %c0_0 = arith.constant 0 : index
    %0 = vector.load %arg2[%c0, %c0_0] : memref<128x512xf32, #tpu.memory_space<vmem>>, vector<128x512xf32>
    %c0_1 = arith.constant 0 : index
    %c0_2 = arith.constant 0 : index
    %c0_3 = arith.constant 0 : index
    %1 = vector.load %arg0[%c0_1, %c0_2, %c0_3] : memref<2x8x1xf32, #tpu.memory_space<vmem>>, vector<2x8x1xf32>
    %c0_4 = arith.constant 0 : index
    %c0_5 = arith.constant 0 : index
    %2 = vector.load %arg1[%c0_4, %c0_5] : memref<1x512xf32, #tpu.memory_space<vmem>>, vector<1x512xf32>
    %3 = vector.shape_cast %2 : vector<1x512xf32> to vector<1x1x512xf32>
    %4 = vector.broadcast %1 : vector<2x8x1xf32> to vector<2x8x512xf32>
    %5 = vector.broadcast %3 : vector<1x1x512xf32> to vector<2x8x512xf32>
    %6 = arith.mulf %4, %5 : vector<2x8x512xf32>
    %c0_6 = arith.constant 0 : index
    %c0_7 = arith.constant 0 : index
    %7 = vector.load %arg3[%c0_6, %c0_7] : memref<1x512xf32, #tpu.memory_space<vmem>>, vector<1x512xf32>
    %8 = vector.shape_cast %7 : vector<1x512xf32> to vector<1x1x512xf32>
    %9 = vector.broadcast %8 : vector<1x1x512xf32> to vector<2x8x512xf32>
    %10 = arith.addf %6, %9 : vector<2x8x512xf32>
    %cst = arith.constant 0.000000e+00 : f32
    %11 = vector.broadcast %cst : f32 to vector<2x128xf32>
    %cst_8 = arith.constant 0.000000e+00 : f32
    %12 = vector.broadcast %cst_8 : f32 to vector<2x128xf32>
    %13 = vector.extract_strided_slice %10 {offsets = [0, 0, 0], sizes = [2, 1, 512], strides = [1, 1, 1]} : vector<2x8x512xf32> to vector<2x1x512xf32>
    %14 = vector.shape_cast %13 : vector<2x1x512xf32> to vector<2x512xf32>
    %cst_9 = arith.constant dense<0.000000e+00> : vector<2x512xf32>
    %15 = tpu.matmul %11, %0, %cst_9 {dimension_numbers = #tpu.dot_dimension_numbers<[1], [0], [0], [1], [0, 0, 1, 1], [], []>} : vector<2x128xf32>, vector<128x512xf32>, vector<2x512xf32> -> vector<2x512xf32>
    %16 = arith.addf %14, %15 : vector<2x512xf32>
    %17 = arith.negf %16 : vector<2x512xf32>
    %18 = math.exp %17 : vector<2x512xf32>
    %cst_10 = arith.constant 1.000000e+00 : f32
    %19 = vector.broadcast %cst_10 : f32 to vector<2x512xf32>
    %20 = arith.addf %19, %18 : vector<2x512xf32>
    %21 = arith.divf %19, %20 : vector<2x512xf32>
    %22 = vector.extract_strided_slice %21 {offsets = [0, 0], sizes = [2, 128], strides = [1, 1]} : vector<2x512xf32> to vector<2x128xf32>
    %23 = vector.extract_strided_slice %21 {offsets = [0, 128], sizes = [2, 128], strides = [1, 1]} : vector<2x512xf32> to vector<2x128xf32>
    %24 = vector.extract_strided_slice %21 {offsets = [0, 256], sizes = [2, 128], strides = [1, 1]} : vector<2x512xf32> to vector<2x128xf32>
    %cst_11 = arith.constant 2.000000e+00 : f32
    %25 = vector.broadcast %cst_11 : f32 to vector<2x128xf32>
    %26 = arith.mulf %25, %24 : vector<2x128xf32>
    %cst_12 = arith.constant 1.000000e+00 : f32
    %27 = vector.broadcast %cst_12 : f32 to vector<2x128xf32>
    %28 = arith.subf %26, %27 : vector<2x128xf32>
    %29 = vector.extract_strided_slice %21 {offsets = [0, 384], sizes = [2, 128], strides = [1, 1]} : vector<2x512xf32> to vector<2x128xf32>
    %30 = arith.mulf %23, %12 : vector<2x128xf32>
    %31 = arith.mulf %22, %28 : vector<2x128xf32>
    %32 = arith.addf %30, %31 : vector<2x128xf32>
    %33 = math.tanh %32 : vector<2x128xf32>
    %34 = arith.mulf %29, %33 : vector<2x128xf32>
    %35 = vector.extract_strided_slice %10 {offsets = [0, 1, 0], sizes = [2, 1, 512], strides = [1, 1, 1]} : vector<2x8x512xf32> to vector<2x1x512xf32>
    %36 = vector.shape_cast %35 : vector<2x1x512xf32> to vector<2x512xf32>
    %cst_13 = arith.constant dense<0.000000e+00> : vector<2x512xf32>
    %37 = tpu.matmul %34, %0, %cst_13 {dimension_numbers = #tpu.dot_dimension_numbers<[1], [0], [0], [1], [0, 0, 1, 1], [], []>} : vector<2x128xf32>, vector<128x512xf32>, vector<2x512xf32> -> vector<2x512xf32>
    %38 = arith.addf %36, %37 : vector<2x512xf32>
    %39 = arith.negf %38 : vector<2x512xf32>
    %40 = math.exp %39 : vector<2x512xf32>
    %cst_14 = arith.constant 1.000000e+00 : f32
    %41 = vector.broadcast %cst_14 : f32 to vector<2x512xf32>
    %42 = arith.addf %41, %40 : vector<2x512xf32>
    %43 = arith.divf %41, %42 : vector<2x512xf32>
    %44 = vector.extract_strided_slice %43 {offsets = [0, 0], sizes = [2, 128], strides = [1, 1]} : vector<2x512xf32> to vector<2x128xf32>
    %45 = vector.extract_strided_slice %43 {offsets = [0, 128], sizes = [2, 128], strides = [1, 1]} : vector<2x512xf32> to vector<2x128xf32>
    %46 = vector.extract_strided_slice %43 {offsets = [0, 256], sizes = [2, 128], strides = [1, 1]} : vector<2x512xf32> to vector<2x128xf32>
    %cst_15 = arith.constant 2.000000e+00 : f32
    %47 = vector.broadcast %cst_15 : f32 to vector<2x128xf32>
    %48 = arith.mulf %47, %46 : vector<2x128xf32>
    %cst_16 = arith.constant 1.000000e+00 : f32
    %49 = vector.broadcast %cst_16 : f32 to vector<2x128xf32>
    %50 = arith.subf %48, %49 : vector<2x128xf32>
    %51 = vector.extract_strided_slice %43 {offsets = [0, 384], sizes = [2, 128], strides = [1, 1]} : vector<2x512xf32> to vector<2x128xf32>
    %52 = arith.mulf %45, %32 : vector<2x128xf32>
    %53 = arith.mulf %44, %50 : vector<2x128xf32>
    %54 = arith.addf %52, %53 : vector<2x128xf32>
    %55 = math.tanh %54 : vector<2x128xf32>
    %56 = arith.mulf %51, %55 : vector<2x128xf32>
    %57 = vector.extract_strided_slice %10 {offsets = [0, 2, 0], sizes = [2, 1, 512], strides = [1, 1, 1]} : vector<2x8x512xf32> to vector<2x1x512xf32>
    %58 = vector.shape_cast %57 : vector<2x1x512xf32> to vector<2x512xf32>
    %cst_17 = arith.constant dense<0.000000e+00> : vector<2x512xf32>
    %59 = tpu.matmul %56, %0, %cst_17 {dimension_numbers = #tpu.dot_dimension_numbers<[1], [0], [0], [1], [0, 0, 1, 1], [], []>} : vector<2x128xf32>, vector<128x512xf32>, vector<2x512xf32> -> vector<2x512xf32>
    %60 = arith.addf %58, %59 : vector<2x512xf32>
    %61 = arith.negf %60 : vector<2x512xf32>
    %62 = math.exp %61 : vector<2x512xf32>
    %cst_18 = arith.constant 1.000000e+00 : f32
    %63 = vector.broadcast %cst_18 : f32 to vector<2x512xf32>
    %64 = arith.addf %63, %62 : vector<2x512xf32>
    %65 = arith.divf %63, %64 : vector<2x512xf32>
    %66 = vector.extract_strided_slice %65 {offsets = [0, 0], sizes = [2, 128], strides = [1, 1]} : vector<2x512xf32> to vector<2x128xf32>
    %67 = vector.extract_strided_slice %65 {offsets = [0, 128], sizes = [2, 128], strides = [1, 1]} : vector<2x512xf32> to vector<2x128xf32>
    %68 = vector.extract_strided_slice %65 {offsets = [0, 256], sizes = [2, 128], strides = [1, 1]} : vector<2x512xf32> to vector<2x128xf32>
    %cst_19 = arith.constant 2.000000e+00 : f32
    %69 = vector.broadcast %cst_19 : f32 to vector<2x128xf32>
    %70 = arith.mulf %69, %68 : vector<2x128xf32>
    %cst_20 = arith.constant 1.000000e+00 : f32
    %71 = vector.broadcast %cst_20 : f32 to vector<2x128xf32>
    %72 = arith.subf %70, %71 : vector<2x128xf32>
    %73 = vector.extract_strided_slice %65 {offsets = [0, 384], sizes = [2, 128], strides = [1, 1]} : vector<2x512xf32> to vector<2x128xf32>
    %74 = arith.mulf %67, %54 : vector<2x128xf32>
    %75 = arith.mulf %66, %72 : vector<2x128xf32>
    %76 = arith.addf %74, %75 : vector<2x128xf32>
    %77 = math.tanh %76 : vector<2x128xf32>
    %78 = arith.mulf %73, %77 : vector<2x128xf32>
    %79 = vector.extract_strided_slice %10 {offsets = [0, 3, 0], sizes = [2, 1, 512], strides = [1, 1, 1]} : vector<2x8x512xf32> to vector<2x1x512xf32>
    %80 = vector.shape_cast %79 : vector<2x1x512xf32> to vector<2x512xf32>
    %cst_21 = arith.constant dense<0.000000e+00> : vector<2x512xf32>
    %81 = tpu.matmul %78, %0, %cst_21 {dimension_numbers = #tpu.dot_dimension_numbers<[1], [0], [0], [1], [0, 0, 1, 1], [], []>} : vector<2x128xf32>, vector<128x512xf32>, vector<2x512xf32> -> vector<2x512xf32>
    %82 = arith.addf %80, %81 : vector<2x512xf32>
    %83 = arith.negf %82 : vector<2x512xf32>
    %84 = math.exp %83 : vector<2x512xf32>
    %cst_22 = arith.constant 1.000000e+00 : f32
    %85 = vector.broadcast %cst_22 : f32 to vector<2x512xf32>
    %86 = arith.addf %85, %84 : vector<2x512xf32>
    %87 = arith.divf %85, %86 : vector<2x512xf32>
    %88 = vector.extract_strided_slice %87 {offsets = [0, 0], sizes = [2, 128], strides = [1, 1]} : vector<2x512xf32> to vector<2x128xf32>
    %89 = vector.extract_strided_slice %87 {offsets = [0, 128], sizes = [2, 128], strides = [1, 1]} : vector<2x512xf32> to vector<2x128xf32>
    %90 = vector.extract_strided_slice %87 {offsets = [0, 256], sizes = [2, 128], strides = [1, 1]} : vector<2x512xf32> to vector<2x128xf32>
    %cst_23 = arith.constant 2.000000e+00 : f32
    %91 = vector.broadcast %cst_23 : f32 to vector<2x128xf32>
    %92 = arith.mulf %91, %90 : vector<2x128xf32>
    %cst_24 = arith.constant 1.000000e+00 : f32
    %93 = vector.broadcast %cst_24 : f32 to vector<2x128xf32>
    %94 = arith.subf %92, %93 : vector<2x128xf32>
    %95 = vector.extract_strided_slice %87 {offsets = [0, 384], sizes = [2, 128], strides = [1, 1]} : vector<2x512xf32> to vector<2x128xf32>
    %96 = arith.mulf %89, %76 : vector<2x128xf32>
    %97 = arith.mulf %88, %94 : vector<2x128xf32>
    %98 = arith.addf %96, %97 : vector<2x128xf32>
    %99 = math.tanh %98 : vector<2x128xf32>
    %100 = arith.mulf %95, %99 : vector<2x128xf32>
    %101 = vector.extract_strided_slice %10 {offsets = [0, 4, 0], sizes = [2, 1, 512], strides = [1, 1, 1]} : vector<2x8x512xf32> to vector<2x1x512xf32>
    %102 = vector.shape_cast %101 : vector<2x1x512xf32> to vector<2x512xf32>
    %cst_25 = arith.constant dense<0.000000e+00> : vector<2x512xf32>
    %103 = tpu.matmul %100, %0, %cst_25 {dimension_numbers = #tpu.dot_dimension_numbers<[1], [0], [0], [1], [0, 0, 1, 1], [], []>} : vector<2x128xf32>, vector<128x512xf32>, vector<2x512xf32> -> vector<2x512xf32>
    %104 = arith.addf %102, %103 : vector<2x512xf32>
    %105 = arith.negf %104 : vector<2x512xf32>
    %106 = math.exp %105 : vector<2x512xf32>
    %cst_26 = arith.constant 1.000000e+00 : f32
    %107 = vector.broadcast %cst_26 : f32 to vector<2x512xf32>
    %108 = arith.addf %107, %106 : vector<2x512xf32>
    %109 = arith.divf %107, %108 : vector<2x512xf32>
    %110 = vector.extract_strided_slice %109 {offsets = [0, 0], sizes = [2, 128], strides = [1, 1]} : vector<2x512xf32> to vector<2x128xf32>
    %111 = vector.extract_strided_slice %109 {offsets = [0, 128], sizes = [2, 128], strides = [1, 1]} : vector<2x512xf32> to vector<2x128xf32>
    %112 = vector.extract_strided_slice %109 {offsets = [0, 256], sizes = [2, 128], strides = [1, 1]} : vector<2x512xf32> to vector<2x128xf32>
    %cst_27 = arith.constant 2.000000e+00 : f32
    %113 = vector.broadcast %cst_27 : f32 to vector<2x128xf32>
    %114 = arith.mulf %113, %112 : vector<2x128xf32>
    %cst_28 = arith.constant 1.000000e+00 : f32
    %115 = vector.broadcast %cst_28 : f32 to vector<2x128xf32>
    %116 = arith.subf %114, %115 : vector<2x128xf32>
    %117 = vector.extract_strided_slice %109 {offsets = [0, 384], sizes = [2, 128], strides = [1, 1]} : vector<2x512xf32> to vector<2x128xf32>
    %118 = arith.mulf %111, %98 : vector<2x128xf32>
    %119 = arith.mulf %110, %116 : vector<2x128xf32>
    %120 = arith.addf %118, %119 : vector<2x128xf32>
    %121 = math.tanh %120 : vector<2x128xf32>
    %122 = arith.mulf %117, %121 : vector<2x128xf32>
    %123 = vector.extract_strided_slice %10 {offsets = [0, 5, 0], sizes = [2, 1, 512], strides = [1, 1, 1]} : vector<2x8x512xf32> to vector<2x1x512xf32>
    %124 = vector.shape_cast %123 : vector<2x1x512xf32> to vector<2x512xf32>
    %cst_29 = arith.constant dense<0.000000e+00> : vector<2x512xf32>
    %125 = tpu.matmul %122, %0, %cst_29 {dimension_numbers = #tpu.dot_dimension_numbers<[1], [0], [0], [1], [0, 0, 1, 1], [], []>} : vector<2x128xf32>, vector<128x512xf32>, vector<2x512xf32> -> vector<2x512xf32>
    %126 = arith.addf %124, %125 : vector<2x512xf32>
    %127 = arith.negf %126 : vector<2x512xf32>
    %128 = math.exp %127 : vector<2x512xf32>
    %cst_30 = arith.constant 1.000000e+00 : f32
    %129 = vector.broadcast %cst_30 : f32 to vector<2x512xf32>
    %130 = arith.addf %129, %128 : vector<2x512xf32>
    %131 = arith.divf %129, %130 : vector<2x512xf32>
    %132 = vector.extract_strided_slice %131 {offsets = [0, 0], sizes = [2, 128], strides = [1, 1]} : vector<2x512xf32> to vector<2x128xf32>
    %133 = vector.extract_strided_slice %131 {offsets = [0, 128], sizes = [2, 128], strides = [1, 1]} : vector<2x512xf32> to vector<2x128xf32>
    %134 = vector.extract_strided_slice %131 {offsets = [0, 256], sizes = [2, 128], strides = [1, 1]} : vector<2x512xf32> to vector<2x128xf32>
    %cst_31 = arith.constant 2.000000e+00 : f32
    %135 = vector.broadcast %cst_31 : f32 to vector<2x128xf32>
    %136 = arith.mulf %135, %134 : vector<2x128xf32>
    %cst_32 = arith.constant 1.000000e+00 : f32
    %137 = vector.broadcast %cst_32 : f32 to vector<2x128xf32>
    %138 = arith.subf %136, %137 : vector<2x128xf32>
    %139 = vector.extract_strided_slice %131 {offsets = [0, 384], sizes = [2, 128], strides = [1, 1]} : vector<2x512xf32> to vector<2x128xf32>
    %140 = arith.mulf %133, %120 : vector<2x128xf32>
    %141 = arith.mulf %132, %138 : vector<2x128xf32>
    %142 = arith.addf %140, %141 : vector<2x128xf32>
    %143 = math.tanh %142 : vector<2x128xf32>
    %144 = arith.mulf %139, %143 : vector<2x128xf32>
    %145 = vector.extract_strided_slice %10 {offsets = [0, 6, 0], sizes = [2, 1, 512], strides = [1, 1, 1]} : vector<2x8x512xf32> to vector<2x1x512xf32>
    %146 = vector.shape_cast %145 : vector<2x1x512xf32> to vector<2x512xf32>
    %cst_33 = arith.constant dense<0.000000e+00> : vector<2x512xf32>
    %147 = tpu.matmul %144, %0, %cst_33 {dimension_numbers = #tpu.dot_dimension_numbers<[1], [0], [0], [1], [0, 0, 1, 1], [], []>} : vector<2x128xf32>, vector<128x512xf32>, vector<2x512xf32> -> vector<2x512xf32>
    %148 = arith.addf %146, %147 : vector<2x512xf32>
    %149 = arith.negf %148 : vector<2x512xf32>
    %150 = math.exp %149 : vector<2x512xf32>
    %cst_34 = arith.constant 1.000000e+00 : f32
    %151 = vector.broadcast %cst_34 : f32 to vector<2x512xf32>
    %152 = arith.addf %151, %150 : vector<2x512xf32>
    %153 = arith.divf %151, %152 : vector<2x512xf32>
    %154 = vector.extract_strided_slice %153 {offsets = [0, 0], sizes = [2, 128], strides = [1, 1]} : vector<2x512xf32> to vector<2x128xf32>
    %155 = vector.extract_strided_slice %153 {offsets = [0, 128], sizes = [2, 128], strides = [1, 1]} : vector<2x512xf32> to vector<2x128xf32>
    %156 = vector.extract_strided_slice %153 {offsets = [0, 256], sizes = [2, 128], strides = [1, 1]} : vector<2x512xf32> to vector<2x128xf32>
    %cst_35 = arith.constant 2.000000e+00 : f32
    %157 = vector.broadcast %cst_35 : f32 to vector<2x128xf32>
    %158 = arith.mulf %157, %156 : vector<2x128xf32>
    %cst_36 = arith.constant 1.000000e+00 : f32
    %159 = vector.broadcast %cst_36 : f32 to vector<2x128xf32>
    %160 = arith.subf %158, %159 : vector<2x128xf32>
    %161 = vector.extract_strided_slice %153 {offsets = [0, 384], sizes = [2, 128], strides = [1, 1]} : vector<2x512xf32> to vector<2x128xf32>
    %162 = arith.mulf %155, %142 : vector<2x128xf32>
    %163 = arith.mulf %154, %160 : vector<2x128xf32>
    %164 = arith.addf %162, %163 : vector<2x128xf32>
    %165 = math.tanh %164 : vector<2x128xf32>
    %166 = arith.mulf %161, %165 : vector<2x128xf32>
    %167 = vector.extract_strided_slice %10 {offsets = [0, 7, 0], sizes = [2, 1, 512], strides = [1, 1, 1]} : vector<2x8x512xf32> to vector<2x1x512xf32>
    %168 = vector.shape_cast %167 : vector<2x1x512xf32> to vector<2x512xf32>
    %cst_37 = arith.constant dense<0.000000e+00> : vector<2x512xf32>
    %169 = tpu.matmul %166, %0, %cst_37 {dimension_numbers = #tpu.dot_dimension_numbers<[1], [0], [0], [1], [0, 0, 1, 1], [], []>} : vector<2x128xf32>, vector<128x512xf32>, vector<2x512xf32> -> vector<2x512xf32>
    %170 = arith.addf %168, %169 : vector<2x512xf32>
    %171 = arith.negf %170 : vector<2x512xf32>
    %172 = math.exp %171 : vector<2x512xf32>
    %cst_38 = arith.constant 1.000000e+00 : f32
    %173 = vector.broadcast %cst_38 : f32 to vector<2x512xf32>
    %174 = arith.addf %173, %172 : vector<2x512xf32>
    %175 = arith.divf %173, %174 : vector<2x512xf32>
    %176 = vector.extract_strided_slice %175 {offsets = [0, 0], sizes = [2, 128], strides = [1, 1]} : vector<2x512xf32> to vector<2x128xf32>
    %177 = vector.extract_strided_slice %175 {offsets = [0, 128], sizes = [2, 128], strides = [1, 1]} : vector<2x512xf32> to vector<2x128xf32>
    %178 = vector.extract_strided_slice %175 {offsets = [0, 256], sizes = [2, 128], strides = [1, 1]} : vector<2x512xf32> to vector<2x128xf32>
    %cst_39 = arith.constant 2.000000e+00 : f32
    %179 = vector.broadcast %cst_39 : f32 to vector<2x128xf32>
    %180 = arith.mulf %179, %178 : vector<2x128xf32>
    %cst_40 = arith.constant 1.000000e+00 : f32
    %181 = vector.broadcast %cst_40 : f32 to vector<2x128xf32>
    %182 = arith.subf %180, %181 : vector<2x128xf32>
    %183 = vector.extract_strided_slice %175 {offsets = [0, 384], sizes = [2, 128], strides = [1, 1]} : vector<2x512xf32> to vector<2x128xf32>
    %184 = arith.mulf %177, %164 : vector<2x128xf32>
    %185 = arith.mulf %176, %182 : vector<2x128xf32>
    %186 = arith.addf %184, %185 : vector<2x128xf32>
    %187 = math.tanh %186 : vector<2x128xf32>
    %188 = arith.mulf %183, %187 : vector<2x128xf32>
    %c0_41 = arith.constant 0 : index
    %c0_42 = arith.constant 0 : index
    %189 = vector.load %arg4[%c0_41, %c0_42] : memref<1x128xf32, #tpu.memory_space<vmem>>, vector<1x128xf32>
    %190 = vector.broadcast %189 : vector<1x128xf32> to vector<2x128xf32>
    %191 = arith.mulf %188, %190 : vector<2x128xf32>
    %cst_43 = arith.constant dense<0.000000e+00> : vector<2xf32>
    %192 = vector.multi_reduction <add>, %191, %cst_43 [1] : vector<2x128xf32> to vector<2xf32>
    %193 = vector.shape_cast %192 : vector<2xf32> to vector<2x1xf32>
    %c0_44 = arith.constant 0 : index
    %c0_45 = arith.constant 0 : index
    %194 = vector.load %arg5[%c0_44, %c0_45] : memref<1x1xf32, #tpu.memory_space<vmem>>, vector<1x1xf32>
    %195 = vector.broadcast %194 : vector<1x1xf32> to vector<2x1xf32>
    %196 = arith.addf %193, %195 : vector<2x1xf32>
    %c0_46 = arith.constant 0 : index
    %c0_47 = arith.constant 0 : index
    %197 = vector.load %arg6[%c0_46, %c0_47] : memref<2x1xf32, #tpu.memory_space<vmem>>, vector<2x1xf32>
    tpu.vector_store %arg6[%c0_46, %c0_47], %196 {strides = array<i32>} : memref<2x1xf32, #tpu.memory_space<vmem>>, vector<2x1xf32>,
    return
  }
}

</mosaic_0001>

<llo_original>
// kernel: lstm_model_forward.1
$region0: #{lstm_model_forward.1}
  #allocation0 [shape = 'u32[]', space=smem, size = 0x4, offset = 0x4, fixed_abs, tag = 'smem constant byte address 0x4 - core index']
  #allocation1 [shape = 'u32[144,128]{1,0:T(1,128)}', space=vmem, size = 0x12000, scoped, tag = 'internal scratch']
  #allocation2 [shape = 'f32[1,1]{1,0:T(1,128)S(1)}', space=vmem, size = 0x200, scoped, tag = 'scoped memory for lstm_model_forward.1']
  %s0 = inlined_call_operand.vmem [shape: f32[2,8,1], index: 0, kind: input, shape index: {}]
  %s1 = inlined_call_operand.vmem [shape: f32[1,512], index: 1, kind: input, shape index: {}]
  %s2 = inlined_call_operand.hbm [shape: f32[128,512], index: 2, kind: input, shape index: {}]
  %s3 = inlined_call_operand.vmem [shape: f32[1,512], index: 3, kind: input, shape index: {}]
  %s4 = inlined_call_operand.vmem [shape: f32[1,128], index: 4, kind: input, shape index: {}]
  %s5 = inlined_call_operand.<no memory space> [shape: f32[1,1], index: 5, kind: input, shape index: {}]
  %s6 = inlined_call_operand.vmem [shape: f32[2,1], index: 6, kind: output, shape index: {}]
  %s7 = sld [smem:[#allocation0]]
  $region38: #{lstm_model_forward.1} parent=0
    _
  %s9 = ssub.s32 1, %s7
  %s10 = scalar_select 0, %s9, %s7
  %v11 = vstv %s5
  %12 = vst [vmem:[#allocation2] sm:$0x1] %v11
  $region1: #{lstm_model_forward.1} parent=0
    #allocation3 [shape = 'u8[262144]{0}', space=vmem, size = 0x40000, scoped, tag = 'input window, operand 2, single buffered']
    #allocation4 [shape = 's32[1]{0}', space=sflag, size = 0x4, scoped, tag = 'scoped memory for lstm_model_forward.1']
    %13 = vsyncpa [#allocation4], 0
    // Predicated region
    $region2: #{lstm_model_forward.1} parent=1 // pred_check
      _
    $region3: #{lstm_model_forward.1} parent=1 // pred_check_branch
      %15 = sbr.rel (0) target = $region5
    $region4: #{lstm_model_forward.1} parent=1 // pred_region
      _
    $region5: #{lstm_model_forward.1} parent=1 // pred_fallthru
      _
    // Predicated region
    $region6: #{lstm_model_forward.1} parent=1 // pred_check
      _
    $region7: #{lstm_model_forward.1} parent=1 // pred_check_branch
      %17 = sbr.rel (0) target = $region9
    $region8: #{lstm_model_forward.1} parent=1 // pred_region
      _
    $region9: #{lstm_model_forward.1} parent=1 // pred_fallthru
      _
    // Predicated region
    $region10: #{lstm_model_forward.1} parent=1 // pred_check
      _
    $region11: #{lstm_model_forward.1} parent=1 // pred_check_branch
      %19 = sbr.rel (0) target = $region13
    $region12: #{lstm_model_forward.1} parent=1 // pred_region
      %s21 = ssub.s32 8192, 8192
      %22 = vsyncadd [#allocation4], %s21
      %s23 = sshll.u32 [#allocation3], 4
      %s24 = int_to_ptr.vmem [resolvable:$true] %s23
      %29 = dma.hbm_to_vmem [thread:$0]  %s2, 8192, %s24, [#allocation4], 512, 512, 32
    $region13: #{lstm_model_forward.1} parent=1 // pred_fallthru
      _
    // Predicated region
    $region14: #{lstm_model_forward.1} parent=1 // pred_check
      _
    $region15: #{lstm_model_forward.1} parent=1 // pred_check_branch
      %31 = sbr.rel (0) target = $region17
    $region16: #{lstm_model_forward.1} parent=1 // pred_region
      _
    $region17: #{lstm_model_forward.1} parent=1 // pred_fallthru
      _
    // Predicated region
    $region18: #{lstm_model_forward.1} parent=1 // pred_check
      _
    $region19: #{lstm_model_forward.1} parent=1 // pred_check_branch
      %33 = sbr.rel (0) target = $region21
    $region20: #{lstm_model_forward.1} parent=1 // pred_region
      _
    $region21: #{lstm_model_forward.1} parent=1 // pred_fallthru
      _
    // Predicated region
    $region22: #{lstm_model_forward.1} parent=1 // pred_check
      _
    $region23: #{lstm_model_forward.1} parent=1 // pred_check_branch
      %35 = sbr.rel (0) target = $region25
    $region24: #{lstm_model_forward.1} parent=1 // pred_region
      _
    $region25: #{lstm_model_forward.1} parent=1 // pred_fallthru
      _
    // Predicated region
    $region26: #{lstm_model_forward.1} parent=1 // pred_check
      _
    $region27: #{lstm_model_forward.1} parent=1 // pred_check_branch
      %37 = sbr.rel (0) target = $region29
    $region28: #{lstm_model_forward.1} parent=1 // pred_region
      %38 = dma.done [#allocation4], 8192
    $region29: #{lstm_model_forward.1} parent=1 // pred_fallthru
      _
    %v39 = vld [vmem:[#allocation3] sm:$0xff]
    %v40 = vld [vmem:[#allocation3 + $0x8] sm:$0xff]
    %v41 = vld [vmem:[#allocation3 + $0x10] sm:$0xff]
    %v42 = vld [vmem:[#allocation3 + $0x18] sm:$0xff]
    %v43 = vld [vmem:[#allocation3 + $0x20] sm:$0xff]
    %v44 = vld [vmem:[#allocation3 + $0x28] sm:$0xff]
    %v45 = vld [vmem:[#allocation3 + $0x30] sm:$0xff]
    %v46 = vld [vmem:[#allocation3 + $0x38] sm:$0xff]
    %v47 = vld [vmem:[#allocation3 + $0x40] sm:$0xff]
    %v48 = vld [vmem:[#allocation3 + $0x48] sm:$0xff]
    %v49 = vld [vmem:[#allocation3 + $0x50] sm:$0xff]
    %v50 = vld [vmem:[#allocation3 + $0x58] sm:$0xff]
    %v51 = vld [vmem:[#allocation3 + $0x60] sm:$0xff]
    %v52 = vld [vmem:[#allocation3 + $0x68] sm:$0xff]
    %v53 = vld [vmem:[#allocation3 + $0x70] sm:$0xff]
    %v54 = vld [vmem:[#allocation3 + $0x78] sm:$0xff]
    %v55 = vld [vmem:[#allocation3 + $0x80] sm:$0xff]
    %v56 = vld [vmem:[#allocation3 + $0x88] sm:$0xff]
    %v57 = vld [vmem:[#allocation3 + $0x90] sm:$0xff]
    %v58 = vld [vmem:[#allocation3 + $0x98] sm:$0xff]
    %v59 = vld [vmem:[#allocation3 + $0xa0] sm:$0xff]
    %v60 = vld [vmem:[#allocation3 + $0xa8] sm:$0xff]
    %v61 = vld [vmem:[#allocation3 + $0xb0] sm:$0xff]
    %v62 = vld [vmem:[#allocation3 + $0xb8] sm:$0xff]
    %v63 = vld [vmem:[#allocation3 + $0xc0] sm:$0xff]
    %v64 = vld [vmem:[#allocation3 + $0xc8] sm:$0xff]
    %v65 = vld [vmem:[#allocation3 + $0xd0] sm:$0xff]
    %v66 = vld [vmem:[#allocation3 + $0xd8] sm:$0xff]
    %v67 = vld [vmem:[#allocation3 + $0xe0] sm:$0xff]
    %v68 = vld [vmem:[#allocation3 + $0xe8] sm:$0xff]
    %v69 = vld [vmem:[#allocation3 + $0xf0] sm:$0xff]
    %v70 = vld [vmem:[#allocation3 + $0xf8] sm:$0xff]
    %v71 = vld [vmem:[#allocation3 + $0x100] sm:$0xff]
    %v72 = vld [vmem:[#allocation3 + $0x108] sm:$0xff]
    %v73 = vld [vmem:[#allocation3 + $0x110] sm:$0xff]
    %v74 = vld [vmem:[#allocation3 + $0x118] sm:$0xff]
    %v75 = vld [vmem:[#allocation3 + $0x120] sm:$0xff]
    %v76 = vld [vmem:[#allocation3 + $0x128] sm:$0xff]
    %v77 = vld [vmem:[#allocation3 + $0x130] sm:$0xff]
    %v78 = vld [vmem:[#allocation3 + $0x138] sm:$0xff]
    %v79 = vld [vmem:[#allocation3 + $0x140] sm:$0xff]
    %v80 = vld [vmem:[#allocation3 + $0x148] sm:$0xff]
    %v81 = vld [vmem:[#allocation3 + $0x150] sm:$0xff]
    %v82 = vld [vmem:[#allocation3 + $0x158] sm:$0xff]
    %v83 = vld [vmem:[#allocation3 + $0x160] sm:$0xff]
    %v84 = vld [vmem:[#allocation3 + $0x168] sm:$0xff]
    %v85 = vld [vmem:[#allocation3 + $0x170] sm:$0xff]
    %v86 = vld [vmem:[#allocation3 + $0x178] sm:$0xff]
    %v87 = vld [vmem:[#allocation3 + $0x180] sm:$0xff]
    %v88 = vld [vmem:[#allocation3 + $0x188] sm:$0xff]
    %v89 = vld [vmem:[#allocation3 + $0x190] sm:$0xff]
    %v90 = vld [vmem:[#allocation3 + $0x198] sm:$0xff]
    %v91 = vld [vmem:[#allocation3 + $0x1a0] sm:$0xff]
    %v92 = vld [vmem:[#allocation3 + $0x1a8] sm:$0xff]
    %v93 = vld [vmem:[#allocation3 + $0x1b0] sm:$0xff]
    %v94 = vld [vmem:[#allocation3 + $0x1b8] sm:$0xff]
    %v95 = vld [vmem:[#allocation3 + $0x1c0] sm:$0xff]
    %v96 = vld [vmem:[#allocation3 + $0x1c8] sm:$0xff]
    %v97 = vld [vmem:[#allocation3 + $0x1d0] sm:$0xff]
    %v98 = vld [vmem:[#allocation3 + $0x1d8] sm:$0xff]
    %v99 = vld [vmem:[#allocation3 + $0x1e0] sm:$0xff]
    %v100 = vld [vmem:[#allocation3 + $0x1e8] sm:$0xff]
    %v101 = vld [vmem:[#allocation3 + $0x1f0] sm:$0xff]
    %v102 = vld [vmem:[#allocation3 + $0x1f8] sm:$0xff]
    %v103 = vld [vmem:[%s0] sm:$0xff]
    %v104 = vld [vmem:[%s0 + $0x8] sm:$0xff]
    %v105 = vld [vmem:[%s1] sm:$0xf]
    %107 = vset.pattern.permute.xlu0 0
    %108 = vperm.xlu0 %107, %v103
    %v109 = vpop.permute.xlu0 %108
    %112 = vset.pattern.permute.xlu0 0
    %113 = vperm.xlu0 %112, %v104
    %v114 = vpop.permute.xlu0 %113
    %v117 = vlaneseq
    %v118 = vshrl.u32 %v117, 7
    %v119 = vsub.s32 0, %v118
    %v120 = vrot.slane %v105, %v119
    %v121 = vlaneseq
    %v122 = vshrl.u32 %v121, 7
    %v123 = vsub.s32 1, %v122
    %v124 = vrot.slane %v105, %v123
    %v125 = vlaneseq
    %v126 = vshrl.u32 %v125, 7
    %v127 = vsub.s32 2, %v126
    %v128 = vrot.slane %v105, %v127
    %v129 = vlaneseq
    %v130 = vshrl.u32 %v129, 7
    %v131 = vsub.s32 3, %v130
    %v132 = vrot.slane %v105, %v131
    %v137 = vmul.f32 %v109, %v120
    %v138 = vmul.f32 %v109, %v124
    %v139 = vmul.f32 %v109, %v128
    %v140 = vmul.f32 %v109, %v132
    %v141 = vmul.f32 %v114, %v120
    %v142 = vmul.f32 %v114, %v124
    %v143 = vmul.f32 %v114, %v128
    %v144 = vmul.f32 %v114, %v132
    %v145 = vld [vmem:[%s3] sm:$0xf]
    %v147 = vlaneseq
    %v148 = vshrl.u32 %v147, 7
    %v149 = vsub.s32 0, %v148
    %v150 = vrot.slane %v145, %v149
    %v151 = vlaneseq
    %v152 = vshrl.u32 %v151, 7
    %v153 = vsub.s32 1, %v152
    %v154 = vrot.slane %v145, %v153
    %v155 = vlaneseq
    %v156 = vshrl.u32 %v155, 7
    %v157 = vsub.s32 2, %v156
    %v158 = vrot.slane %v145, %v157
    %v159 = vlaneseq
    %v160 = vshrl.u32 %v159, 7
    %v161 = vsub.s32 3, %v160
    %v162 = vrot.slane %v145, %v161
    %v167 = vadd.f32 %v137, %v150
    %v168 = vadd.f32 %v138, %v154
    %v169 = vadd.f32 %v139, %v158
    %v170 = vadd.f32 %v140, %v162
    %v171 = vadd.f32 %v141, %v150
    %v172 = vadd.f32 %v142, %v154
    %v173 = vadd.f32 %v143, %v158
    %v174 = vadd.f32 %v144, %v162
    %175 = vmatprep.subr.mxu0 %v100
    %176 = vmatpush1.msra.mxu0 %v99
    %177 = vmatprep.subr.mxu0 %v96
    %178 = vmatpush1.msra.mxu0 %v95
    %179 = vmatprep.subr.mxu0 %v92
    %180 = vmatpush1.msra.mxu0 %v91
    %181 = vmatprep.subr.mxu0 %v88
    %182 = vmatpush1.msra.mxu0 %v87
    %183 = vmatprep.subr.mxu0 %v84
    %184 = vmatpush1.msra.mxu0 %v83
    %185 = vmatprep.subr.mxu0 %v80
    %186 = vmatpush1.msra.mxu0 %v79
    %187 = vmatprep.subr.mxu0 %v76
    %188 = vmatpush1.msra.mxu0 %v75
    %189 = vmatprep.subr.mxu0 %v72
    %190 = vmatpush1.msra.mxu0 %v71
    %191 = vmatprep.subr.mxu0 %v68
    %192 = vmatpush1.msra.mxu0 %v67
    %193 = vmatprep.subr.mxu0 %v64
    %194 = vmatpush1.msra.mxu0 %v63
    %195 = vmatprep.subr.mxu0 %v60
    %196 = vmatpush1.msra.mxu0 %v59
    %197 = vmatprep.subr.mxu0 %v56
    %198 = vmatpush1.msra.mxu0 %v55
    %199 = vmatprep.subr.mxu0 %v52
    %200 = vmatpush1.msra.mxu0 %v51
    %201 = vmatprep.subr.mxu0 %v48
    %202 = vmatpush1.msra.mxu0 %v47
    %203 = vmatprep.subr.mxu0 %v44
    %204 = vmatpush1.msra.mxu0 %v43
    %205 = vmatprep.subr.mxu0 %v40
    %206 = vmatpush1.msra.mxu0 %v39
    %207 = vmatprep.subr.mxu0 0.0
    %208 = vmatpush2.msra.mxu0 0.0
    %209 = vmatprep.subr.mxu0 0.0
    %210 = vmatpush2.msra.mxu0 0.0
    %211 = vmatprep.subr.mxu0 0.0
    %212 = vmatpush2.msra.mxu0 0.0
    %213 = vmatprep.subr.mxu0 0.0
    %214 = vmatpush2.msra.mxu0 0.0
    %215 = vmatprep.subr.mxu0 0.0
    %216 = vmatpush2.msra.mxu0 0.0
    %217 = vmatprep.subr.mxu0 0.0
    %218 = vmatpush2.msra.mxu0 0.0
    %219 = vmatprep.subr.mxu0 0.0
    %220 = vmatpush2.msra.mxu0 0.0
    %221 = vmatprep.subr.mxu0 0.0
    %222 = vmatpush2.msra.mxu0 0.0
    %223 = vmatprep.subr.mxu0 0.0
    %224 = vmatpush2.msra.mxu0 0.0
    %225 = vmatprep.subr.mxu0 0.0
    %226 = vmatpush2.msra.mxu0 0.0
    %227 = vmatprep.subr.mxu0 0.0
    %228 = vmatpush2.msra.mxu0 0.0
    %229 = vmatprep.subr.mxu0 0.0
    %230 = vmatpush2.msra.mxu0 0.0
    %231 = vmatprep.subr.mxu0 0.0
    %232 = vmatpush2.msra.mxu0 0.0
    %233 = vmatprep.subr.mxu0 0.0
    %234 = vmatpush2.msra.mxu0 0.0
    %235 = vmatprep.subr.mxu0 0.0
    %236 = vmatpush2.msra.mxu0 0.0
    %237 = vmatprep.subr.mxu0 0.0
    %238 = vmatpush2.msra.mxu0 0.0
    %239 = vmatprep.mubr.f32.mxu0 0.0
    %240 = vmatmul.mubr.f32.gmra.mxu0 0.0
    %v241 = vpop.f32.mrf.mxu0
    %v242 = vadd.f32 0.0, %v241
    %v243 = vpop.f32.mrf.mxu0
    %v244 = vadd.f32 0.0, %v243
    %245 = vdwg.mxu0
    %246 = vmatprep.subr.mxu0 %v102
    %247 = vmatpush1.msra.mxu0 %v101
    %248 = vmatprep.subr.mxu0 %v98
    %249 = vmatpush1.msra.mxu0 %v97
    %250 = vmatprep.subr.mxu0 %v94
    %251 = vmatpush1.msra.mxu0 %v93
    %252 = vmatprep.subr.mxu0 %v90
    %253 = vmatpush1.msra.mxu0 %v89
    %254 = vmatprep.subr.mxu0 %v86
    %255 = vmatpush1.msra.mxu0 %v85
    %256 = vmatprep.subr.mxu0 %v82
    %257 = vmatpush1.msra.mxu0 %v81
    %258 = vmatprep.subr.mxu0 %v78
    %259 = vmatpush1.msra.mxu0 %v77
    %260 = vmatprep.subr.mxu0 %v74
    %261 = vmatpush1.msra.mxu0 %v73
    %262 = vmatprep.subr.mxu0 %v70
    %263 = vmatpush1.msra.mxu0 %v69
    %264 = vmatprep.subr.mxu0 %v66
    %265 = vmatpush1.msra.mxu0 %v65
    %266 = vmatprep.subr.mxu0 %v62
    %267 = vmatpush1.msra.mxu0 %v61
    %268 = vmatprep.subr.mxu0 %v58
    %269 = vmatpush1.msra.mxu0 %v57
    %270 = vmatprep.subr.mxu0 %v54
    %271 = vmatpush1.msra.mxu0 %v53
    %272 = vmatprep.subr.mxu0 %v50
    %273 = vmatpush1.msra.mxu0 %v49
    %274 = vmatprep.subr.mxu0 %v46
    %275 = vmatpush1.msra.mxu0 %v45
    %276 = vmatprep.subr.mxu0 %v42
    %277 = vmatpush1.msra.mxu0 %v41
    %278 = vmatprep.subr.mxu0 0.0
    %279 = vmatpush2.msra.mxu0 0.0
    %280 = vmatprep.subr.mxu0 0.0
    %281 = vmatpush2.msra.mxu0 0.0
    %282 = vmatprep.subr.mxu0 0.0
    %283 = vmatpush2.msra.mxu0 0.0
    %284 = vmatprep.subr.mxu0 0.0
    %285 = vmatpush2.msra.mxu0 0.0
    %286 = vmatprep.subr.mxu0 0.0
    %287 = vmatpush2.msra.mxu0 0.0
    %288 = vmatprep.subr.mxu0 0.0
    %289 = vmatpush2.msra.mxu0 0.0
    %290 = vmatprep.subr.mxu0 0.0
    %291 = vmatpush2.msra.mxu0 0.0
    %292 = vmatprep.subr.mxu0 0.0
    %293 = vmatpush2.msra.mxu0 0.0
    %294 = vmatprep.subr.mxu0 0.0
    %295 = vmatpush2.msra.mxu0 0.0
    %296 = vmatprep.subr.mxu0 0.0
    %297 = vmatpush2.msra.mxu0 0.0
    %298 = vmatprep.subr.mxu0 0.0
    %299 = vmatpush2.msra.mxu0 0.0
    %300 = vmatprep.subr.mxu0 0.0
    %301 = vmatpush2.msra.mxu0 0.0
    %302 = vmatprep.subr.mxu0 0.0
    %303 = vmatpush2.msra.mxu0 0.0
    %304 = vmatprep.subr.mxu0 0.0
    %305 = vmatpush2.msra.mxu0 0.0
    %306 = vmatprep.subr.mxu0 0.0
    %307 = vmatpush2.msra.mxu0 0.0
    %308 = vmatprep.subr.mxu0 0.0
    %309 = vmatpush2.msra.mxu0 0.0
    %310 = vmatprep.mubr.f32.mxu0 0.0
    %311 = vmatmul.mubr.f32.gmra.mxu0 0.0
    %v312 = vpop.f32.mrf.mxu0
    %v313 = vadd.f32 0.0, %v312
    %v314 = vpop.f32.mrf.mxu0
    %v315 = vadd.f32 0.0, %v314
    %316 = vdwg.mxu0
    %v321 = vrot.slane %v242, 1
    %v322 = vrot.slane %v244, 1
    %v323 = vrot.slane %v313, 1
    %v324 = vrot.slane %v315, 1
    %v333 = vadd.f32 %v167, %v242
    %v334 = vadd.f32 %v168, %v244
    %v335 = vadd.f32 %v169, %v313
    %v336 = vadd.f32 %v170, %v315
    %v337 = vadd.f32 %v171, %v321
    %v338 = vadd.f32 %v172, %v322
    %v339 = vadd.f32 %v173, %v323
    %v340 = vadd.f32 %v174, %v324
    %v341 = vxor.u32 %v333, 2147483648
    %v342 = vxor.u32 %v334, 2147483648
    %v343 = vxor.u32 %v335, 2147483648
    %v344 = vxor.u32 %v336, 2147483648
    %v345 = vxor.u32 %v337, 2147483648
    %v346 = vxor.u32 %v338, 2147483648
    %v347 = vxor.u32 %v339, 2147483648
    %v348 = vxor.u32 %v340, 2147483648
    %v349 = vmul.f32 %v341, 1.442695
    %v350 = vpow.pop %v349
    %v351 = vmul.f32 %v342, 1.442695
    %v352 = vpow.pop %v351
    %v353 = vmul.f32 %v343, 1.442695
    %v354 = vpow.pop %v353
    %v355 = vmul.f32 %v344, 1.442695
    %v356 = vpow.pop %v355
    %v357 = vmul.f32 %v345, 1.442695
    %v358 = vpow.pop %v357
    %v359 = vmul.f32 %v346, 1.442695
    %v360 = vpow.pop %v359
    %v361 = vmul.f32 %v347, 1.442695
    %v362 = vpow.pop %v361
    %v363 = vmul.f32 %v348, 1.442695
    %v364 = vpow.pop %v363
    %v365 = vadd.f32 %v350, 1.0
    %v366 = vadd.f32 %v352, 1.0
    %v367 = vadd.f32 %v354, 1.0
    %v368 = vadd.f32 %v356, 1.0
    %v369 = vadd.f32 %v358, 1.0
    %v370 = vadd.f32 %v360, 1.0
    %v371 = vadd.f32 %v362, 1.0
    %v372 = vadd.f32 %v364, 1.0
    %v373 = vrcp.pop %v365
    %v374 = vmul.f32 1.0, %v373
    %v375 = vrcp.pop %v366
    %v376 = vmul.f32 1.0, %v375
    %v377 = vrcp.pop %v367
    %v378 = vmul.f32 1.0, %v377
    %v379 = vrcp.pop %v368
    %v380 = vmul.f32 1.0, %v379
    %v381 = vrcp.pop %v369
    %v382 = vmul.f32 1.0, %v381
    %v383 = vrcp.pop %v370
    %v384 = vmul.f32 1.0, %v383
    %v385 = vrcp.pop %v371
    %v386 = vmul.f32 1.0, %v385
    %v387 = vrcp.pop %v372
    %v388 = vmul.f32 1.0, %v387
    %v389 = vmul.f32 %v378, 2.0
    %v390 = vmul.f32 %v386, 2.0
    %v391 = vsub.f32 %v389, 1.0
    %v392 = vsub.f32 %v390, 1.0
    %v393 = vmul.f32 %v376, 0.0
    %v394 = vmul.f32 %v384, 0.0
    %v395 = vmul.f32 %v374, %v391
    %v396 = vmul.f32 %v382, %v392
    %v397 = vadd.f32 %v393, %v395
    %v398 = vadd.f32 %v394, %v396
    %v399 = vtanh.pop %v397
    %v400 = vtanh.pop %v398
    %v401 = vmul.f32 %v380, %v399
    %v402 = vmul.f32 %v388, %v400
    %v405 = vrot.slane %v402, 7
    %vm406 = vcmask 1041409
    %v407 = vsel %vm406, %v405, %v401
    %409 = vmatprep.subr.mxu0 %v100
    %410 = vmatpush1.msra.mxu0 %v99
    %411 = vmatprep.subr.mxu0 %v96
    %412 = vmatpush1.msra.mxu0 %v95
    %413 = vmatprep.subr.mxu0 %v92
    %414 = vmatpush1.msra.mxu0 %v91
    %415 = vmatprep.subr.mxu0 %v88
    %416 = vmatpush1.msra.mxu0 %v87
    %417 = vmatprep.subr.mxu0 %v84
    %418 = vmatpush1.msra.mxu0 %v83
    %419 = vmatprep.subr.mxu0 %v80
    %420 = vmatpush1.msra.mxu0 %v79
    %421 = vmatprep.subr.mxu0 %v76
    %422 = vmatpush1.msra.mxu0 %v75
    %423 = vmatprep.subr.mxu0 %v72
    %424 = vmatpush1.msra.mxu0 %v71
    %425 = vmatprep.subr.mxu0 %v68
    %426 = vmatpush1.msra.mxu0 %v67
    %427 = vmatprep.subr.mxu0 %v64
    %428 = vmatpush1.msra.mxu0 %v63
    %429 = vmatprep.subr.mxu0 %v60
    %430 = vmatpush1.msra.mxu0 %v59
    %431 = vmatprep.subr.mxu0 %v56
    %432 = vmatpush1.msra.mxu0 %v55
    %433 = vmatprep.subr.mxu0 %v52
    %434 = vmatpush1.msra.mxu0 %v51
    %435 = vmatprep.subr.mxu0 %v48
    %436 = vmatpush1.msra.mxu0 %v47
    %437 = vmatprep.subr.mxu0 %v44
    %438 = vmatpush1.msra.mxu0 %v43
    %439 = vmatprep.subr.mxu0 %v40
    %440 = vmatpush1.msra.mxu0 %v39
    %441 = vmatprep.subr.mxu0 0.0
    %442 = vmatpush2.msra.mxu0 0.0
    %443 = vmatprep.subr.mxu0 0.0
    %444 = vmatpush2.msra.mxu0 0.0
    %445 = vmatprep.subr.mxu0 0.0
    %446 = vmatpush2.msra.mxu0 0.0
    %447 = vmatprep.subr.mxu0 0.0
    %448 = vmatpush2.msra.mxu0 0.0
    %449 = vmatprep.subr.mxu0 0.0
    %450 = vmatpush2.msra.mxu0 0.0
    %451 = vmatprep.subr.mxu0 0.0
    %452 = vmatpush2.msra.mxu0 0.0
    %453 = vmatprep.subr.mxu0 0.0
    %454 = vmatpush2.msra.mxu0 0.0
    %455 = vmatprep.subr.mxu0 0.0
    %456 = vmatpush2.msra.mxu0 0.0
    %457 = vmatprep.subr.mxu0 0.0
    %458 = vmatpush2.msra.mxu0 0.0
    %459 = vmatprep.subr.mxu0 0.0
    %460 = vmatpush2.msra.mxu0 0.0
    %461 = vmatprep.subr.mxu0 0.0
    %462 = vmatpush2.msra.mxu0 0.0
    %463 = vmatprep.subr.mxu0 0.0
    %464 = vmatpush2.msra.mxu0 0.0
    %465 = vmatprep.subr.mxu0 0.0
    %466 = vmatpush2.msra.mxu0 0.0
    %467 = vmatprep.subr.mxu0 0.0
    %468 = vmatpush2.msra.mxu0 0.0
    %469 = vmatprep.subr.mxu0 0.0
    %470 = vmatpush2.msra.mxu0 0.0
    %471 = vmatprep.subr.mxu0 0.0
    %472 = vmatpush2.msra.mxu0 0.0
    %473 = vmatprep.mubr.f32.mxu0 0.0
    %474 = vmatmul.mubr.f32.gmra.mxu0 %v407
    %v475 = vpop.f32.mrf.mxu0
    %v476 = vadd.f32 0.0, %v475
    %v477 = vpop.f32.mrf.mxu0
    %v478 = vadd.f32 0.0, %v477
    %479 = vdwg.mxu0
    %480 = vmatprep.subr.mxu0 %v102
    %481 = vmatpush1.msra.mxu0 %v101
    %482 = vmatprep.subr.mxu0 %v98
    %483 = vmatpush1.msra.mxu0 %v97
    %484 = vmatprep.subr.mxu0 %v94
    %485 = vmatpush1.msra.mxu0 %v93
    %486 = vmatprep.subr.mxu0 %v90
    %487 = vmatpush1.msra.mxu0 %v89
    %488 = vmatprep.subr.mxu0 %v86
    %489 = vmatpush1.msra.mxu0 %v85
    %490 = vmatprep.subr.mxu0 %v82
    %491 = vmatpush1.msra.mxu0 %v81
    %492 = vmatprep.subr.mxu0 %v78
    %493 = vmatpush1.msra.mxu0 %v77
    %494 = vmatprep.subr.mxu0 %v74
    %495 = vmatpush1.msra.mxu0 %v73
    %496 = vmatprep.subr.mxu0 %v70
    %497 = vmatpush1.msra.mxu0 %v69
    %498 = vmatprep.subr.mxu0 %v66
    %499 = vmatpush1.msra.mxu0 %v65
    %500 = vmatprep.subr.mxu0 %v62
    %501 = vmatpush1.msra.mxu0 %v61
    %502 = vmatprep.subr.mxu0 %v58
    %503 = vmatpush1.msra.mxu0 %v57
    %504 = vmatprep.subr.mxu0 %v54
    %505 = vmatpush1.msra.mxu0 %v53
    %506 = vmatprep.subr.mxu0 %v50
    %507 = vmatpush1.msra.mxu0 %v49
    %508 = vmatprep.subr.mxu0 %v46
    %509 = vmatpush1.msra.mxu0 %v45
    %510 = vmatprep.subr.mxu0 %v42
    %511 = vmatpush1.msra.mxu0 %v41
    %512 = vmatprep.subr.mxu0 0.0
    %513 = vmatpush2.msra.mxu0 0.0
    %514 = vmatprep.subr.mxu0 0.0
    %515 = vmatpush2.msra.mxu0 0.0
    %516 = vmatprep.subr.mxu0 0.0
    %517 = vmatpush2.msra.mxu0 0.0
    %518 = vmatprep.subr.mxu0 0.0
    %519 = vmatpush2.msra.mxu0 0.0
    %520 = vmatprep.subr.mxu0 0.0
    %521 = vmatpush2.msra.mxu0 0.0
    %522 = vmatprep.subr.mxu0 0.0
    %523 = vmatpush2.msra.mxu0 0.0
    %524 = vmatprep.subr.mxu0 0.0
    %525 = vmatpush2.msra.mxu0 0.0
    %526 = vmatprep.subr.mxu0 0.0
    %527 = vmatpush2.msra.mxu0 0.0
    %528 = vmatprep.subr.mxu0 0.0
    %529 = vmatpush2.msra.mxu0 0.0
    %530 = vmatprep.subr.mxu0 0.0
    %531 = vmatpush2.msra.mxu0 0.0
    %532 = vmatprep.subr.mxu0 0.0
    %533 = vmatpush2.msra.mxu0 0.0
    %534 = vmatprep.subr.mxu0 0.0
    %535 = vmatpush2.msra.mxu0 0.0
    %536 = vmatprep.subr.mxu0 0.0
    %537 = vmatpush2.msra.mxu0 0.0
    %538 = vmatprep.subr.mxu0 0.0
    %539 = vmatpush2.msra.mxu0 0.0
    %540 = vmatprep.subr.mxu0 0.0
    %541 = vmatpush2.msra.mxu0 0.0
    %542 = vmatprep.subr.mxu0 0.0
    %543 = vmatpush2.msra.mxu0 0.0
    %544 = vmatprep.mubr.f32.mxu0 0.0
    %545 = vmatmul.mubr.f32.gmra.mxu0 %v407
    %v546 = vpop.f32.mrf.mxu0
    %v547 = vadd.f32 0.0, %v546
    %v548 = vpop.f32.mrf.mxu0
    %v549 = vadd.f32 0.0, %v548
    %550 = vdwg.mxu0
    %v555 = vrot.slane %v476, 7
    %v556 = vrot.slane %v478, 7
    %v557 = vrot.slane %v547, 7
    %v558 = vrot.slane %v549, 7
    %v567 = vadd.f32 %v167, %v555
    %v568 = vadd.f32 %v168, %v556
    %v569 = vadd.f32 %v169, %v557
    %v570 = vadd.f32 %v170, %v558
    %v571 = vadd.f32 %v171, %v476
    %v572 = vadd.f32 %v172, %v478
    %v573 = vadd.f32 %v173, %v547
    %v574 = vadd.f32 %v174, %v549
    %v575 = vxor.u32 %v567, 2147483648
    %v576 = vxor.u32 %v568, 2147483648
    %v577 = vxor.u32 %v569, 2147483648
    %v578 = vxor.u32 %v570, 2147483648
    %v579 = vxor.u32 %v571, 2147483648
    %v580 = vxor.u32 %v572, 2147483648
    %v581 = vxor.u32 %v573, 2147483648
    %v582 = vxor.u32 %v574, 2147483648
    %v583 = vmul.f32 %v575, 1.442695
    %v584 = vpow.pop %v583
    %v585 = vmul.f32 %v576, 1.442695
    %v586 = vpow.pop %v585
    %v587 = vmul.f32 %v577, 1.442695
    %v588 = vpow.pop %v587
    %v589 = vmul.f32 %v578, 1.442695
    %v590 = vpow.pop %v589
    %v591 = vmul.f32 %v579, 1.442695
    %v592 = vpow.pop %v591
    %v593 = vmul.f32 %v580, 1.442695
    %v594 = vpow.pop %v593
    %v595 = vmul.f32 %v581, 1.442695
    %v596 = vpow.pop %v595
    %v597 = vmul.f32 %v582, 1.442695
    %v598 = vpow.pop %v597
    %v599 = vadd.f32 %v584, 1.0
    %v600 = vadd.f32 %v586, 1.0
    %v601 = vadd.f32 %v588, 1.0
    %v602 = vadd.f32 %v590, 1.0
    %v603 = vadd.f32 %v592, 1.0
    %v604 = vadd.f32 %v594, 1.0
    %v605 = vadd.f32 %v596, 1.0
    %v606 = vadd.f32 %v598, 1.0
    %v607 = vrcp.pop %v599
    %v608 = vmul.f32 1.0, %v607
    %v609 = vrcp.pop %v600
    %v610 = vmul.f32 1.0, %v609
    %v611 = vrcp.pop %v601
    %v612 = vmul.f32 1.0, %v611
    %v613 = vrcp.pop %v602
    %v614 = vmul.f32 1.0, %v613
    %v615 = vrcp.pop %v603
    %v616 = vmul.f32 1.0, %v615
    %v617 = vrcp.pop %v604
    %v618 = vmul.f32 1.0, %v617
    %v619 = vrcp.pop %v605
    %v620 = vmul.f32 1.0, %v619
    %v621 = vrcp.pop %v606
    %v622 = vmul.f32 1.0, %v621
    %v623 = vmul.f32 %v612, 2.0
    %v624 = vmul.f32 %v620, 2.0
    %v625 = vsub.f32 %v623, 1.0
    %v626 = vsub.f32 %v624, 1.0
    %v629 = vrot.slane %v397, 7
    %v630 = vrot.slane %v398, 7
    %v633 = vmul.f32 %v610, %v629
    %v634 = vmul.f32 %v618, %v630
    %v635 = vmul.f32 %v608, %v625
    %v636 = vmul.f32 %v616, %v626
    %v637 = vadd.f32 %v633, %v635
    %v638 = vadd.f32 %v634, %v636
    %v639 = vtanh.pop %v637
    %v640 = vtanh.pop %v638
    %v641 = vmul.f32 %v614, %v639
    %v642 = vmul.f32 %v622, %v640
    %v645 = vrot.slane %v641, 1
    %v646 = vsel %vm406, %v642, %v645
    %648 = vmatprep.subr.mxu0 %v100
    %649 = vmatpush1.msra.mxu0 %v99
    %650 = vmatprep.subr.mxu0 %v96
    %651 = vmatpush1.msra.mxu0 %v95
    %652 = vmatprep.subr.mxu0 %v92
    %653 = vmatpush1.msra.mxu0 %v91
    %654 = vmatprep.subr.mxu0 %v88
    %655 = vmatpush1.msra.mxu0 %v87
    %656 = vmatprep.subr.mxu0 %v84
    %657 = vmatpush1.msra.mxu0 %v83
    %658 = vmatprep.subr.mxu0 %v80
    %659 = vmatpush1.msra.mxu0 %v79
    %660 = vmatprep.subr.mxu0 %v76
    %661 = vmatpush1.msra.mxu0 %v75
    %662 = vmatprep.subr.mxu0 %v72
    %663 = vmatpush1.msra.mxu0 %v71
    %664 = vmatprep.subr.mxu0 %v68
    %665 = vmatpush1.msra.mxu0 %v67
    %666 = vmatprep.subr.mxu0 %v64
    %667 = vmatpush1.msra.mxu0 %v63
    %668 = vmatprep.subr.mxu0 %v60
    %669 = vmatpush1.msra.mxu0 %v59
    %670 = vmatprep.subr.mxu0 %v56
    %671 = vmatpush1.msra.mxu0 %v55
    %672 = vmatprep.subr.mxu0 %v52
    %673 = vmatpush1.msra.mxu0 %v51
    %674 = vmatprep.subr.mxu0 %v48
    %675 = vmatpush1.msra.mxu0 %v47
    %676 = vmatprep.subr.mxu0 %v44
    %677 = vmatpush1.msra.mxu0 %v43
    %678 = vmatprep.subr.mxu0 %v40
    %679 = vmatpush1.msra.mxu0 %v39
    %680 = vmatprep.subr.mxu0 0.0
    %681 = vmatpush2.msra.mxu0 0.0
    %682 = vmatprep.subr.mxu0 0.0
    %683 = vmatpush2.msra.mxu0 0.0
    %684 = vmatprep.subr.mxu0 0.0
    %685 = vmatpush2.msra.mxu0 0.0
    %686 = vmatprep.subr.mxu0 0.0
    %687 = vmatpush2.msra.mxu0 0.0
    %688 = vmatprep.subr.mxu0 0.0
    %689 = vmatpush2.msra.mxu0 0.0
    %690 = vmatprep.subr.mxu0 0.0
    %691 = vmatpush2.msra.mxu0 0.0
    %692 = vmatprep.subr.mxu0 0.0
    %693 = vmatpush2.msra.mxu0 0.0
    %694 = vmatprep.subr.mxu0 0.0
    %695 = vmatpush2.msra.mxu0 0.0
    %696 = vmatprep.subr.mxu0 0.0
    %697 = vmatpush2.msra.mxu0 0.0
    %698 = vmatprep.subr.mxu0 0.0
    %699 = vmatpush2.msra.mxu0 0.0
    %700 = vmatprep.subr.mxu0 0.0
    %701 = vmatpush2.msra.mxu0 0.0
    %702 = vmatprep.subr.mxu0 0.0
    %703 = vmatpush2.msra.mxu0 0.0
    %704 = vmatprep.subr.mxu0 0.0
    %705 = vmatpush2.msra.mxu0 0.0
    %706 = vmatprep.subr.mxu0 0.0
    %707 = vmatpush2.msra.mxu0 0.0
    %708 = vmatprep.subr.mxu0 0.0
    %709 = vmatpush2.msra.mxu0 0.0
    %710 = vmatprep.subr.mxu0 0.0
    %711 = vmatpush2.msra.mxu0 0.0
    %712 = vmatprep.mubr.f32.mxu0 0.0
    %713 = vmatmul.mubr.f32.gmra.mxu0 %v646
    %v714 = vpop.f32.mrf.mxu0
    %v715 = vadd.f32 0.0, %v714
    %v716 = vpop.f32.mrf.mxu0
    %v717 = vadd.f32 0.0, %v716
    %718 = vdwg.mxu0
    %719 = vmatprep.subr.mxu0 %v102
    %720 = vmatpush1.msra.mxu0 %v101
    %721 = vmatprep.subr.mxu0 %v98
    %722 = vmatpush1.msra.mxu0 %v97
    %723 = vmatprep.subr.mxu0 %v94
    %724 = vmatpush1.msra.mxu0 %v93
    %725 = vmatprep.subr.mxu0 %v90
    %726 = vmatpush1.msra.mxu0 %v89
    %727 = vmatprep.subr.mxu0 %v86
    %728 = vmatpush1.msra.mxu0 %v85
    %729 = vmatprep.subr.mxu0 %v82
    %730 = vmatpush1.msra.mxu0 %v81
    %731 = vmatprep.subr.mxu0 %v78
    %732 = vmatpush1.msra.mxu0 %v77
    %733 = vmatprep.subr.mxu0 %v74
    %734 = vmatpush1.msra.mxu0 %v73
    %735 = vmatprep.subr.mxu0 %v70
    %736 = vmatpush1.msra.mxu0 %v69
    %737 = vmatprep.subr.mxu0 %v66
    %738 = vmatpush1.msra.mxu0 %v65
    %739 = vmatprep.subr.mxu0 %v62
    %740 = vmatpush1.msra.mxu0 %v61
    %741 = vmatprep.subr.mxu0 %v58
    %742 = vmatpush1.msra.mxu0 %v57
    %743 = vmatprep.subr.mxu0 %v54
    %744 = vmatpush1.msra.mxu0 %v53
    %745 = vmatprep.subr.mxu0 %v50
    %746 = vmatpush1.msra.mxu0 %v49
    %747 = vmatprep.subr.mxu0 %v46
    %748 = vmatpush1.msra.mxu0 %v45
    %749 = vmatprep.subr.mxu0 %v42
    %750 = vmatpush1.msra.mxu0 %v41
    %751 = vmatprep.subr.mxu0 0.0
    %752 = vmatpush2.msra.mxu0 0.0
    %753 = vmatprep.subr.mxu0 0.0
    %754 = vmatpush2.msra.mxu0 0.0
    %755 = vmatprep.subr.mxu0 0.0
    %756 = vmatpush2.msra.mxu0 0.0
    %757 = vmatprep.subr.mxu0 0.0
    %758 = vmatpush2.msra.mxu0 0.0
    %759 = vmatprep.subr.mxu0 0.0
    %760 = vmatpush2.msra.mxu0 0.0
    %761 = vmatprep.subr.mxu0 0.0
    %762 = vmatpush2.msra.mxu0 0.0
    %763 = vmatprep.subr.mxu0 0.0
    %764 = vmatpush2.msra.mxu0 0.0
    %765 = vmatprep.subr.mxu0 0.0
    %766 = vmatpush2.msra.mxu0 0.0
    %767 = vmatprep.subr.mxu0 0.0
    %768 = vmatpush2.msra.mxu0 0.0
    %769 = vmatprep.subr.mxu0 0.0
    %770 = vmatpush2.msra.mxu0 0.0
    %771 = vmatprep.subr.mxu0 0.0
    %772 = vmatpush2.msra.mxu0 0.0
    %773 = vmatprep.subr.mxu0 0.0
    %774 = vmatpush2.msra.mxu0 0.0
    %775 = vmatprep.subr.mxu0 0.0
    %776 = vmatpush2.msra.mxu0 0.0
    %777 = vmatprep.subr.mxu0 0.0
    %778 = vmatpush2.msra.mxu0 0.0
    %779 = vmatprep.subr.mxu0 0.0
    %780 = vmatpush2.msra.mxu0 0.0
    %781 = vmatprep.subr.mxu0 0.0
    %782 = vmatpush2.msra.mxu0 0.0
    %783 = vmatprep.mubr.f32.mxu0 0.0
    %784 = vmatmul.mubr.f32.gmra.mxu0 %v646
    %v785 = vpop.f32.mrf.mxu0
    %v786 = vadd.f32 0.0, %v785
    %v787 = vpop.f32.mrf.mxu0
    %v788 = vadd.f32 0.0, %v787
    %789 = vdwg.mxu0
    %v794 = vrot.slane %v715, 6
    %v795 = vrot.slane %v717, 6
    %v796 = vrot.slane %v786, 6
    %v797 = vrot.slane %v788, 6
    %v798 = vrot.slane %v715, 7
    %v799 = vrot.slane %v717, 7
    %v800 = vrot.slane %v786, 7
    %v801 = vrot.slane %v788, 7
    %v810 = vadd.f32 %v167, %v794
    %v811 = vadd.f32 %v168, %v795
    %v812 = vadd.f32 %v169, %v796
    %v813 = vadd.f32 %v170, %v797
    %v814 = vadd.f32 %v171, %v798
    %v815 = vadd.f32 %v172, %v799
    %v816 = vadd.f32 %v173, %v800
    %v817 = vadd.f32 %v174, %v801
    %v818 = vxor.u32 %v810, 2147483648
    %v819 = vxor.u32 %v811, 2147483648
    %v820 = vxor.u32 %v812, 2147483648
    %v821 = vxor.u32 %v813, 2147483648
    %v822 = vxor.u32 %v814, 2147483648
    %v823 = vxor.u32 %v815, 2147483648
    %v824 = vxor.u32 %v816, 2147483648
    %v825 = vxor.u32 %v817, 2147483648
    %v826 = vmul.f32 %v818, 1.442695
    %v827 = vpow.pop %v826
    %v828 = vmul.f32 %v819, 1.442695
    %v829 = vpow.pop %v828
    %v830 = vmul.f32 %v820, 1.442695
    %v831 = vpow.pop %v830
    %v832 = vmul.f32 %v821, 1.442695
    %v833 = vpow.pop %v832
    %v834 = vmul.f32 %v822, 1.442695
    %v835 = vpow.pop %v834
    %v836 = vmul.f32 %v823, 1.442695
    %v837 = vpow.pop %v836
    %v838 = vmul.f32 %v824, 1.442695
    %v839 = vpow.pop %v838
    %v840 = vmul.f32 %v825, 1.442695
    %v841 = vpow.pop %v840
    %v842 = vadd.f32 %v827, 1.0
    %v843 = vadd.f32 %v829, 1.0
    %v844 = vadd.f32 %v831, 1.0
    %v845 = vadd.f32 %v833, 1.0
    %v846 = vadd.f32 %v835, 1.0
    %v847 = vadd.f32 %v837, 1.0
    %v848 = vadd.f32 %v839, 1.0
    %v849 = vadd.f32 %v841, 1.0
    %v850 = vrcp.pop %v842
    %v851 = vmul.f32 1.0, %v850
    %v852 = vrcp.pop %v843
    %v853 = vmul.f32 1.0, %v852
    %v854 = vrcp.pop %v844
    %v855 = vmul.f32 1.0, %v854
    %v856 = vrcp.pop %v845
    %v857 = vmul.f32 1.0, %v856
    %v858 = vrcp.pop %v846
    %v859 = vmul.f32 1.0, %v858
    %v860 = vrcp.pop %v847
    %v861 = vmul.f32 1.0, %v860
    %v862 = vrcp.pop %v848
    %v863 = vmul.f32 1.0, %v862
    %v864 = vrcp.pop %v849
    %v865 = vmul.f32 1.0, %v864
    %v866 = vmul.f32 %v855, 2.0
    %v867 = vmul.f32 %v863, 2.0
    %v868 = vsub.f32 %v866, 1.0
    %v869 = vsub.f32 %v867, 1.0
    %v872 = vrot.slane %v637, 7
    %v873 = vrot.slane %v638, 7
    %v876 = vmul.f32 %v853, %v872
    %v877 = vmul.f32 %v861, %v873
    %v878 = vmul.f32 %v851, %v868
    %v879 = vmul.f32 %v859, %v869
    %v880 = vadd.f32 %v876, %v878
    %v881 = vadd.f32 %v877, %v879
    %v882 = vtanh.pop %v880
    %v883 = vtanh.pop %v881
    %v884 = vmul.f32 %v857, %v882
    %v885 = vmul.f32 %v865, %v883
    %v888 = vrot.slane %v884, 2
    %v889 = vrot.slane %v885, 1
    %v890 = vsel %vm406, %v889, %v888
    %892 = vmatprep.subr.mxu0 %v100
    %893 = vmatpush1.msra.mxu0 %v99
    %894 = vmatprep.subr.mxu0 %v96
    %895 = vmatpush1.msra.mxu0 %v95
    %896 = vmatprep.subr.mxu0 %v92
    %897 = vmatpush1.msra.mxu0 %v91
    %898 = vmatprep.subr.mxu0 %v88
    %899 = vmatpush1.msra.mxu0 %v87
    %900 = vmatprep.subr.mxu0 %v84
    %901 = vmatpush1.msra.mxu0 %v83
    %902 = vmatprep.subr.mxu0 %v80
    %903 = vmatpush1.msra.mxu0 %v79
    %904 = vmatprep.subr.mxu0 %v76
    %905 = vmatpush1.msra.mxu0 %v75
    %906 = vmatprep.subr.mxu0 %v72
    %907 = vmatpush1.msra.mxu0 %v71
    %908 = vmatprep.subr.mxu0 %v68
    %909 = vmatpush1.msra.mxu0 %v67
    %910 = vmatprep.subr.mxu0 %v64
    %911 = vmatpush1.msra.mxu0 %v63
    %912 = vmatprep.subr.mxu0 %v60
    %913 = vmatpush1.msra.mxu0 %v59
    %914 = vmatprep.subr.mxu0 %v56
    %915 = vmatpush1.msra.mxu0 %v55
    %916 = vmatprep.subr.mxu0 %v52
    %917 = vmatpush1.msra.mxu0 %v51
    %918 = vmatprep.subr.mxu0 %v48
    %919 = vmatpush1.msra.mxu0 %v47
    %920 = vmatprep.subr.mxu0 %v44
    %921 = vmatpush1.msra.mxu0 %v43
    %922 = vmatprep.subr.mxu0 %v40
    %923 = vmatpush1.msra.mxu0 %v39
    %924 = vmatprep.subr.mxu0 0.0
    %925 = vmatpush2.msra.mxu0 0.0
    %926 = vmatprep.subr.mxu0 0.0
    %927 = vmatpush2.msra.mxu0 0.0
    %928 = vmatprep.subr.mxu0 0.0
    %929 = vmatpush2.msra.mxu0 0.0
    %930 = vmatprep.subr.mxu0 0.0
    %931 = vmatpush2.msra.mxu0 0.0
    %932 = vmatprep.subr.mxu0 0.0
    %933 = vmatpush2.msra.mxu0 0.0
    %934 = vmatprep.subr.mxu0 0.0
    %935 = vmatpush2.msra.mxu0 0.0
    %936 = vmatprep.subr.mxu0 0.0
    %937 = vmatpush2.msra.mxu0 0.0
    %938 = vmatprep.subr.mxu0 0.0
    %939 = vmatpush2.msra.mxu0 0.0
    %940 = vmatprep.subr.mxu0 0.0
    %941 = vmatpush2.msra.mxu0 0.0
    %942 = vmatprep.subr.mxu0 0.0
    %943 = vmatpush2.msra.mxu0 0.0
    %944 = vmatprep.subr.mxu0 0.0
    %945 = vmatpush2.msra.mxu0 0.0
    %946 = vmatprep.subr.mxu0 0.0
    %947 = vmatpush2.msra.mxu0 0.0
    %948 = vmatprep.subr.mxu0 0.0
    %949 = vmatpush2.msra.mxu0 0.0
    %950 = vmatprep.subr.mxu0 0.0
    %951 = vmatpush2.msra.mxu0 0.0
    %952 = vmatprep.subr.mxu0 0.0
    %953 = vmatpush2.msra.mxu0 0.0
    %954 = vmatprep.subr.mxu0 0.0
    %955 = vmatpush2.msra.mxu0 0.0
    %956 = vmatprep.mubr.f32.mxu0 0.0
    %957 = vmatmul.mubr.f32.gmra.mxu0 %v890
    %v958 = vpop.f32.mrf.mxu0
    %v959 = vadd.f32 0.0, %v958
    %v960 = vpop.f32.mrf.mxu0
    %v961 = vadd.f32 0.0, %v960
    %962 = vdwg.mxu0
    %963 = vmatprep.subr.mxu0 %v102
    %964 = vmatpush1.msra.mxu0 %v101
    %965 = vmatprep.subr.mxu0 %v98
    %966 = vmatpush1.msra.mxu0 %v97
    %967 = vmatprep.subr.mxu0 %v94
    %968 = vmatpush1.msra.mxu0 %v93
    %969 = vmatprep.subr.mxu0 %v90
    %970 = vmatpush1.msra.mxu0 %v89
    %971 = vmatprep.subr.mxu0 %v86
    %972 = vmatpush1.msra.mxu0 %v85
    %973 = vmatprep.subr.mxu0 %v82
    %974 = vmatpush1.msra.mxu0 %v81
    %975 = vmatprep.subr.mxu0 %v78
    %976 = vmatpush1.msra.mxu0 %v77
    %977 = vmatprep.subr.mxu0 %v74
    %978 = vmatpush1.msra.mxu0 %v73
    %979 = vmatprep.subr.mxu0 %v70
    %980 = vmatpush1.msra.mxu0 %v69
    %981 = vmatprep.subr.mxu0 %v66
    %982 = vmatpush1.msra.mxu0 %v65
    %983 = vmatprep.subr.mxu0 %v62
    %984 = vmatpush1.msra.mxu0 %v61
    %985 = vmatprep.subr.mxu0 %v58
    %986 = vmatpush1.msra.mxu0 %v57
    %987 = vmatprep.subr.mxu0 %v54
    %988 = vmatpush1.msra.mxu0 %v53
    %989 = vmatprep.subr.mxu0 %v50
    %990 = vmatpush1.msra.mxu0 %v49
    %991 = vmatprep.subr.mxu0 %v46
    %992 = vmatpush1.msra.mxu0 %v45
    %993 = vmatprep.subr.mxu0 %v42
    %994 = vmatpush1.msra.mxu0 %v41
    %995 = vmatprep.subr.mxu0 0.0
    %996 = vmatpush2.msra.mxu0 0.0
    %997 = vmatprep.subr.mxu0 0.0
    %998 = vmatpush2.msra.mxu0 0.0
    %999 = vmatprep.subr.mxu0 0.0
    %1000 = vmatpush2.msra.mxu0 0.0
    %1001 = vmatprep.subr.mxu0 0.0
    %1002 = vmatpush2.msra.mxu0 0.0
    %1003 = vmatprep.subr.mxu0 0.0
    %1004 = vmatpush2.msra.mxu0 0.0
    %1005 = vmatprep.subr.mxu0 0.0
    %1006 = vmatpush2.msra.mxu0 0.0
    %1007 = vmatprep.subr.mxu0 0.0
    %1008 = vmatpush2.msra.mxu0 0.0
    %1009 = vmatprep.subr.mxu0 0.0
    %1010 = vmatpush2.msra.mxu0 0.0
    %1011 = vmatprep.subr.mxu0 0.0
    %1012 = vmatpush2.msra.mxu0 0.0
    %1013 = vmatprep.subr.mxu0 0.0
    %1014 = vmatpush2.msra.mxu0 0.0
    %1015 = vmatprep.subr.mxu0 0.0
    %1016 = vmatpush2.msra.mxu0 0.0
    %1017 = vmatprep.subr.mxu0 0.0
    %1018 = vmatpush2.msra.mxu0 0.0
    %1019 = vmatprep.subr.mxu0 0.0
    %1020 = vmatpush2.msra.mxu0 0.0
    %1021 = vmatprep.subr.mxu0 0.0
    %1022 = vmatpush2.msra.mxu0 0.0
    %1023 = vmatprep.subr.mxu0 0.0
    %1024 = vmatpush2.msra.mxu0 0.0
    %1025 = vmatprep.subr.mxu0 0.0
    %1026 = vmatpush2.msra.mxu0 0.0
    %1027 = vmatprep.mubr.f32.mxu0 0.0
    %1028 = vmatmul.mubr.f32.gmra.mxu0 %v890
    %v1029 = vpop.f32.mrf.mxu0
    %v1030 = vadd.f32 0.0, %v1029
    %v1031 = vpop.f32.mrf.mxu0
    %v1032 = vadd.f32 0.0, %v1031
    %1033 = vdwg.mxu0
    %v1038 = vrot.slane %v959, 5
    %v1039 = vrot.slane %v961, 5
    %v1040 = vrot.slane %v1030, 5
    %v1041 = vrot.slane %v1032, 5
    %v1042 = vrot.slane %v959, 6
    %v1043 = vrot.slane %v961, 6
    %v1044 = vrot.slane %v1030, 6
    %v1045 = vrot.slane %v1032, 6
    %v1054 = vadd.f32 %v167, %v1038
    %v1055 = vadd.f32 %v168, %v1039
    %v1056 = vadd.f32 %v169, %v1040
    %v1057 = vadd.f32 %v170, %v1041
    %v1058 = vadd.f32 %v171, %v1042
    %v1059 = vadd.f32 %v172, %v1043
    %v1060 = vadd.f32 %v173, %v1044
    %v1061 = vadd.f32 %v174, %v1045
    %v1062 = vxor.u32 %v1054, 2147483648
    %v1063 = vxor.u32 %v1055, 2147483648
    %v1064 = vxor.u32 %v1056, 2147483648
    %v1065 = vxor.u32 %v1057, 2147483648
    %v1066 = vxor.u32 %v1058, 2147483648
    %v1067 = vxor.u32 %v1059, 2147483648
    %v1068 = vxor.u32 %v1060, 2147483648
    %v1069 = vxor.u32 %v1061, 2147483648
    %v1070 = vmul.f32 %v1062, 1.442695
    %v1071 = vpow.pop %v1070
    %v1072 = vmul.f32 %v1063, 1.442695
    %v1073 = vpow.pop %v1072
    %v1074 = vmul.f32 %v1064, 1.442695
    %v1075 = vpow.pop %v1074
    %v1076 = vmul.f32 %v1065, 1.442695
    %v1077 = vpow.pop %v1076
    %v1078 = vmul.f32 %v1066, 1.442695
    %v1079 = vpow.pop %v1078
    %v1080 = vmul.f32 %v1067, 1.442695
    %v1081 = vpow.pop %v1080
    %v1082 = vmul.f32 %v1068, 1.442695
    %v1083 = vpow.pop %v1082
    %v1084 = vmul.f32 %v1069, 1.442695
    %v1085 = vpow.pop %v1084
    %v1086 = vadd.f32 %v1071, 1.0
    %v1087 = vadd.f32 %v1073, 1.0
    %v1088 = vadd.f32 %v1075, 1.0
    %v1089 = vadd.f32 %v1077, 1.0
    %v1090 = vadd.f32 %v1079, 1.0
    %v1091 = vadd.f32 %v1081, 1.0
    %v1092 = vadd.f32 %v1083, 1.0
    %v1093 = vadd.f32 %v1085, 1.0
    %v1094 = vrcp.pop %v1086
    %v1095 = vmul.f32 1.0, %v1094
    %v1096 = vrcp.pop %v1087
    %v1097 = vmul.f32 1.0, %v1096
    %v1098 = vrcp.pop %v1088
    %v1099 = vmul.f32 1.0, %v1098
    %v1100 = vrcp.pop %v1089
    %v1101 = vmul.f32 1.0, %v1100
    %v1102 = vrcp.pop %v1090
    %v1103 = vmul.f32 1.0, %v1102
    %v1104 = vrcp.pop %v1091
    %v1105 = vmul.f32 1.0, %v1104
    %v1106 = vrcp.pop %v1092
    %v1107 = vmul.f32 1.0, %v1106
    %v1108 = vrcp.pop %v1093
    %v1109 = vmul.f32 1.0, %v1108
    %v1110 = vmul.f32 %v1099, 2.0
    %v1111 = vmul.f32 %v1107, 2.0
    %v1112 = vsub.f32 %v1110, 1.0
    %v1113 = vsub.f32 %v1111, 1.0
    %v1116 = vrot.slane %v880, 7
    %v1117 = vrot.slane %v881, 7
    %v1120 = vmul.f32 %v1097, %v1116
    %v1121 = vmul.f32 %v1105, %v1117
    %v1122 = vmul.f32 %v1095, %v1112
    %v1123 = vmul.f32 %v1103, %v1113
    %v1124 = vadd.f32 %v1120, %v1122
    %v1125 = vadd.f32 %v1121, %v1123
    %v1126 = vtanh.pop %v1124
    %v1127 = vtanh.pop %v1125
    %v1128 = vmul.f32 %v1101, %v1126
    %v1129 = vmul.f32 %v1109, %v1127
    %v1132 = vrot.slane %v1128, 3
    %v1133 = vrot.slane %v1129, 2
    %v1134 = vsel %vm406, %v1133, %v1132
    %1136 = vmatprep.subr.mxu0 %v100
    %1137 = vmatpush1.msra.mxu0 %v99
    %1138 = vmatprep.subr.mxu0 %v96
    %1139 = vmatpush1.msra.mxu0 %v95
    %1140 = vmatprep.subr.mxu0 %v92
    %1141 = vmatpush1.msra.mxu0 %v91
    %1142 = vmatprep.subr.mxu0 %v88
    %1143 = vmatpush1.msra.mxu0 %v87
    %1144 = vmatprep.subr.mxu0 %v84
    %1145 = vmatpush1.msra.mxu0 %v83
    %1146 = vmatprep.subr.mxu0 %v80
    %1147 = vmatpush1.msra.mxu0 %v79
    %1148 = vmatprep.subr.mxu0 %v76
    %1149 = vmatpush1.msra.mxu0 %v75
    %1150 = vmatprep.subr.mxu0 %v72
    %1151 = vmatpush1.msra.mxu0 %v71
    %1152 = vmatprep.subr.mxu0 %v68
    %1153 = vmatpush1.msra.mxu0 %v67
    %1154 = vmatprep.subr.mxu0 %v64
    %1155 = vmatpush1.msra.mxu0 %v63
    %1156 = vmatprep.subr.mxu0 %v60
    %1157 = vmatpush1.msra.mxu0 %v59
    %1158 = vmatprep.subr.mxu0 %v56
    %1159 = vmatpush1.msra.mxu0 %v55
    %1160 = vmatprep.subr.mxu0 %v52
    %1161 = vmatpush1.msra.mxu0 %v51
    %1162 = vmatprep.subr.mxu0 %v48
    %1163 = vmatpush1.msra.mxu0 %v47
    %1164 = vmatprep.subr.mxu0 %v44
    %1165 = vmatpush1.msra.mxu0 %v43
    %1166 = vmatprep.subr.mxu0 %v40
    %1167 = vmatpush1.msra.mxu0 %v39
    %1168 = vmatprep.subr.mxu0 0.0
    %1169 = vmatpush2.msra.mxu0 0.0
    %1170 = vmatprep.subr.mxu0 0.0
    %1171 = vmatpush2.msra.mxu0 0.0
    %1172 = vmatprep.subr.mxu0 0.0
    %1173 = vmatpush2.msra.mxu0 0.0
    %1174 = vmatprep.subr.mxu0 0.0
    %1175 = vmatpush2.msra.mxu0 0.0
    %1176 = vmatprep.subr.mxu0 0.0
    %1177 = vmatpush2.msra.mxu0 0.0
    %1178 = vmatprep.subr.mxu0 0.0
    %1179 = vmatpush2.msra.mxu0 0.0
    %1180 = vmatprep.subr.mxu0 0.0
    %1181 = vmatpush2.msra.mxu0 0.0
    %1182 = vmatprep.subr.mxu0 0.0
    %1183 = vmatpush2.msra.mxu0 0.0
    %1184 = vmatprep.subr.mxu0 0.0
    %1185 = vmatpush2.msra.mxu0 0.0
    %1186 = vmatprep.subr.mxu0 0.0
    %1187 = vmatpush2.msra.mxu0 0.0
    %1188 = vmatprep.subr.mxu0 0.0
    %1189 = vmatpush2.msra.mxu0 0.0
    %1190 = vmatprep.subr.mxu0 0.0
    %1191 = vmatpush2.msra.mxu0 0.0
    %1192 = vmatprep.subr.mxu0 0.0
    %1193 = vmatpush2.msra.mxu0 0.0
    %1194 = vmatprep.subr.mxu0 0.0
    %1195 = vmatpush2.msra.mxu0 0.0
    %1196 = vmatprep.subr.mxu0 0.0
    %1197 = vmatpush2.msra.mxu0 0.0
    %1198 = vmatprep.subr.mxu0 0.0
    %1199 = vmatpush2.msra.mxu0 0.0
    %1200 = vmatprep.mubr.f32.mxu0 0.0
    %1201 = vmatmul.mubr.f32.gmra.mxu0 %v1134
    %v1202 = vpop.f32.mrf.mxu0
    %v1203 = vadd.f32 0.0, %v1202
    %v1204 = vpop.f32.mrf.mxu0
    %v1205 = vadd.f32 0.0, %v1204
    %1206 = vdwg.mxu0
    %1207 = vmatprep.subr.mxu0 %v102
    %1208 = vmatpush1.msra.mxu0 %v101
    %1209 = vmatprep.subr.mxu0 %v98
    %1210 = vmatpush1.msra.mxu0 %v97
    %1211 = vmatprep.subr.mxu0 %v94
    %1212 = vmatpush1.msra.mxu0 %v93
    %1213 = vmatprep.subr.mxu0 %v90
    %1214 = vmatpush1.msra.mxu0 %v89
    %1215 = vmatprep.subr.mxu0 %v86
    %1216 = vmatpush1.msra.mxu0 %v85
    %1217 = vmatprep.subr.mxu0 %v82
    %1218 = vmatpush1.msra.mxu0 %v81
    %1219 = vmatprep.subr.mxu0 %v78
    %1220 = vmatpush1.msra.mxu0 %v77
    %1221 = vmatprep.subr.mxu0 %v74
    %1222 = vmatpush1.msra.mxu0 %v73
    %1223 = vmatprep.subr.mxu0 %v70
    %1224 = vmatpush1.msra.mxu0 %v69
    %1225 = vmatprep.subr.mxu0 %v66
    %1226 = vmatpush1.msra.mxu0 %v65
    %1227 = vmatprep.subr.mxu0 %v62
    %1228 = vmatpush1.msra.mxu0 %v61
    %1229 = vmatprep.subr.mxu0 %v58
    %1230 = vmatpush1.msra.mxu0 %v57
    %1231 = vmatprep.subr.mxu0 %v54
    %1232 = vmatpush1.msra.mxu0 %v53
    %1233 = vmatprep.subr.mxu0 %v50
    %1234 = vmatpush1.msra.mxu0 %v49
    %1235 = vmatprep.subr.mxu0 %v46
    %1236 = vmatpush1.msra.mxu0 %v45
    %1237 = vmatprep.subr.mxu0 %v42
    %1238 = vmatpush1.msra.mxu0 %v41
    %1239 = vmatprep.subr.mxu0 0.0
    %1240 = vmatpush2.msra.mxu0 0.0
    %1241 = vmatprep.subr.mxu0 0.0
    %1242 = vmatpush2.msra.mxu0 0.0
    %1243 = vmatprep.subr.mxu0 0.0
    %1244 = vmatpush2.msra.mxu0 0.0
    %1245 = vmatprep.subr.mxu0 0.0
    %1246 = vmatpush2.msra.mxu0 0.0
    %1247 = vmatprep.subr.mxu0 0.0
    %1248 = vmatpush2.msra.mxu0 0.0
    %1249 = vmatprep.subr.mxu0 0.0
    %1250 = vmatpush2.msra.mxu0 0.0
    %1251 = vmatprep.subr.mxu0 0.0
    %1252 = vmatpush2.msra.mxu0 0.0
    %1253 = vmatprep.subr.mxu0 0.0
    %1254 = vmatpush2.msra.mxu0 0.0
    %1255 = vmatprep.subr.mxu0 0.0
    %1256 = vmatpush2.msra.mxu0 0.0
    %1257 = vmatprep.subr.mxu0 0.0
    %1258 = vmatpush2.msra.mxu0 0.0
    %1259 = vmatprep.subr.mxu0 0.0
    %1260 = vmatpush2.msra.mxu0 0.0
    %1261 = vmatprep.subr.mxu0 0.0
    %1262 = vmatpush2.msra.mxu0 0.0
    %1263 = vmatprep.subr.mxu0 0.0
    %1264 = vmatpush2.msra.mxu0 0.0
    %1265 = vmatprep.subr.mxu0 0.0
    %1266 = vmatpush2.msra.mxu0 0.0
    %1267 = vmatprep.subr.mxu0 0.0
    %1268 = vmatpush2.msra.mxu0 0.0
    %1269 = vmatprep.subr.mxu0 0.0
    %1270 = vmatpush2.msra.mxu0 0.0
    %1271 = vmatprep.mubr.f32.mxu0 0.0
    %1272 = vmatmul.mubr.f32.gmra.mxu0 %v1134
    %v1273 = vpop.f32.mrf.mxu0
    %v1274 = vadd.f32 0.0, %v1273
    %v1275 = vpop.f32.mrf.mxu0
    %v1276 = vadd.f32 0.0, %v1275
    %1277 = vdwg.mxu0
    %v1282 = vrot.slane %v1203, 4
    %v1283 = vrot.slane %v1205, 4
    %v1284 = vrot.slane %v1274, 4
    %v1285 = vrot.slane %v1276, 4
    %v1286 = vrot.slane %v1203, 5
    %v1287 = vrot.slane %v1205, 5
    %v1288 = vrot.slane %v1274, 5
    %v1289 = vrot.slane %v1276, 5
    %v1298 = vadd.f32 %v167, %v1282
    %v1299 = vadd.f32 %v168, %v1283
    %v1300 = vadd.f32 %v169, %v1284
    %v1301 = vadd.f32 %v170, %v1285
    %v1302 = vadd.f32 %v171, %v1286
    %v1303 = vadd.f32 %v172, %v1287
    %v1304 = vadd.f32 %v173, %v1288
    %v1305 = vadd.f32 %v174, %v1289
    %v1306 = vxor.u32 %v1298, 2147483648
    %v1307 = vxor.u32 %v1299, 2147483648
    %v1308 = vxor.u32 %v1300, 2147483648
    %v1309 = vxor.u32 %v1301, 2147483648
    %v1310 = vxor.u32 %v1302, 2147483648
    %v1311 = vxor.u32 %v1303, 2147483648
    %v1312 = vxor.u32 %v1304, 2147483648
    %v1313 = vxor.u32 %v1305, 2147483648
    %v1314 = vmul.f32 %v1306, 1.442695
    %v1315 = vpow.pop %v1314
    %v1316 = vmul.f32 %v1307, 1.442695
    %v1317 = vpow.pop %v1316
    %v1318 = vmul.f32 %v1308, 1.442695
    %v1319 = vpow.pop %v1318
    %v1320 = vmul.f32 %v1309, 1.442695
    %v1321 = vpow.pop %v1320
    %v1322 = vmul.f32 %v1310, 1.442695
    %v1323 = vpow.pop %v1322
    %v1324 = vmul.f32 %v1311, 1.442695
    %v1325 = vpow.pop %v1324
    %v1326 = vmul.f32 %v1312, 1.442695
    %v1327 = vpow.pop %v1326
    %v1328 = vmul.f32 %v1313, 1.442695
    %v1329 = vpow.pop %v1328
    %v1330 = vadd.f32 %v1315, 1.0
    %v1331 = vadd.f32 %v1317, 1.0
    %v1332 = vadd.f32 %v1319, 1.0
    %v1333 = vadd.f32 %v1321, 1.0
    %v1334 = vadd.f32 %v1323, 1.0
    %v1335 = vadd.f32 %v1325, 1.0
    %v1336 = vadd.f32 %v1327, 1.0
    %v1337 = vadd.f32 %v1329, 1.0
    %v1338 = vrcp.pop %v1330
    %v1339 = vmul.f32 1.0, %v1338
    %v1340 = vrcp.pop %v1331
    %v1341 = vmul.f32 1.0, %v1340
    %v1342 = vrcp.pop %v1332
    %v1343 = vmul.f32 1.0, %v1342
    %v1344 = vrcp.pop %v1333
    %v1345 = vmul.f32 1.0, %v1344
    %v1346 = vrcp.pop %v1334
    %v1347 = vmul.f32 1.0, %v1346
    %v1348 = vrcp.pop %v1335
    %v1349 = vmul.f32 1.0, %v1348
    %v1350 = vrcp.pop %v1336
    %v1351 = vmul.f32 1.0, %v1350
    %v1352 = vrcp.pop %v1337
    %v1353 = vmul.f32 1.0, %v1352
    %v1354 = vmul.f32 %v1343, 2.0
    %v1355 = vmul.f32 %v1351, 2.0
    %v1356 = vsub.f32 %v1354, 1.0
    %v1357 = vsub.f32 %v1355, 1.0
    %v1360 = vrot.slane %v1124, 7
    %v1361 = vrot.slane %v1125, 7
    %v1364 = vmul.f32 %v1341, %v1360
    %v1365 = vmul.f32 %v1349, %v1361
    %v1366 = vmul.f32 %v1339, %v1356
    %v1367 = vmul.f32 %v1347, %v1357
    %v1368 = vadd.f32 %v1364, %v1366
    %v1369 = vadd.f32 %v1365, %v1367
    %v1370 = vtanh.pop %v1368
    %v1371 = vtanh.pop %v1369
    %v1372 = vmul.f32 %v1345, %v1370
    %v1373 = vmul.f32 %v1353, %v1371
    %v1376 = vrot.slane %v1372, 4
    %v1377 = vrot.slane %v1373, 3
    %v1378 = vsel %vm406, %v1377, %v1376
    %1380 = vmatprep.subr.mxu0 %v100
    %1381 = vmatpush1.msra.mxu0 %v99
    %1382 = vmatprep.subr.mxu0 %v96
    %1383 = vmatpush1.msra.mxu0 %v95
    %1384 = vmatprep.subr.mxu0 %v92
    %1385 = vmatpush1.msra.mxu0 %v91
    %1386 = vmatprep.subr.mxu0 %v88
    %1387 = vmatpush1.msra.mxu0 %v87
    %1388 = vmatprep.subr.mxu0 %v84
    %1389 = vmatpush1.msra.mxu0 %v83
    %1390 = vmatprep.subr.mxu0 %v80
    %1391 = vmatpush1.msra.mxu0 %v79
    %1392 = vmatprep.subr.mxu0 %v76
    %1393 = vmatpush1.msra.mxu0 %v75
    %1394 = vmatprep.subr.mxu0 %v72
    %1395 = vmatpush1.msra.mxu0 %v71
    %1396 = vmatprep.subr.mxu0 %v68
    %1397 = vmatpush1.msra.mxu0 %v67
    %1398 = vmatprep.subr.mxu0 %v64
    %1399 = vmatpush1.msra.mxu0 %v63
    %1400 = vmatprep.subr.mxu0 %v60
    %1401 = vmatpush1.msra.mxu0 %v59
    %1402 = vmatprep.subr.mxu0 %v56
    %1403 = vmatpush1.msra.mxu0 %v55
    %1404 = vmatprep.subr.mxu0 %v52
    %1405 = vmatpush1.msra.mxu0 %v51
    %1406 = vmatprep.subr.mxu0 %v48
    %1407 = vmatpush1.msra.mxu0 %v47
    %1408 = vmatprep.subr.mxu0 %v44
    %1409 = vmatpush1.msra.mxu0 %v43
    %1410 = vmatprep.subr.mxu0 %v40
    %1411 = vmatpush1.msra.mxu0 %v39
    %1412 = vmatprep.subr.mxu0 0.0
    %1413 = vmatpush2.msra.mxu0 0.0
    %1414 = vmatprep.subr.mxu0 0.0
    %1415 = vmatpush2.msra.mxu0 0.0
    %1416 = vmatprep.subr.mxu0 0.0
    %1417 = vmatpush2.msra.mxu0 0.0
    %1418 = vmatprep.subr.mxu0 0.0
    %1419 = vmatpush2.msra.mxu0 0.0
    %1420 = vmatprep.subr.mxu0 0.0
    %1421 = vmatpush2.msra.mxu0 0.0
    %1422 = vmatprep.subr.mxu0 0.0
    %1423 = vmatpush2.msra.mxu0 0.0
    %1424 = vmatprep.subr.mxu0 0.0
    %1425 = vmatpush2.msra.mxu0 0.0
    %1426 = vmatprep.subr.mxu0 0.0
    %1427 = vmatpush2.msra.mxu0 0.0
    %1428 = vmatprep.subr.mxu0 0.0
    %1429 = vmatpush2.msra.mxu0 0.0
    %1430 = vmatprep.subr.mxu0 0.0
    %1431 = vmatpush2.msra.mxu0 0.0
    %1432 = vmatprep.subr.mxu0 0.0
    %1433 = vmatpush2.msra.mxu0 0.0
    %1434 = vmatprep.subr.mxu0 0.0
    %1435 = vmatpush2.msra.mxu0 0.0
    %1436 = vmatprep.subr.mxu0 0.0
    %1437 = vmatpush2.msra.mxu0 0.0
    %1438 = vmatprep.subr.mxu0 0.0
    %1439 = vmatpush2.msra.mxu0 0.0
    %1440 = vmatprep.subr.mxu0 0.0
    %1441 = vmatpush2.msra.mxu0 0.0
    %1442 = vmatprep.subr.mxu0 0.0
    %1443 = vmatpush2.msra.mxu0 0.0
    %1444 = vmatprep.mubr.f32.mxu0 0.0
    %1445 = vmatmul.mubr.f32.gmra.mxu0 %v1378
    %v1446 = vpop.f32.mrf.mxu0
    %v1447 = vadd.f32 0.0, %v1446
    %v1448 = vpop.f32.mrf.mxu0
    %v1449 = vadd.f32 0.0, %v1448
    %1450 = vdwg.mxu0
    %1451 = vmatprep.subr.mxu0 %v102
    %1452 = vmatpush1.msra.mxu0 %v101
    %1453 = vmatprep.subr.mxu0 %v98
    %1454 = vmatpush1.msra.mxu0 %v97
    %1455 = vmatprep.subr.mxu0 %v94
    %1456 = vmatpush1.msra.mxu0 %v93
    %1457 = vmatprep.subr.mxu0 %v90
    %1458 = vmatpush1.msra.mxu0 %v89
    %1459 = vmatprep.subr.mxu0 %v86
    %1460 = vmatpush1.msra.mxu0 %v85
    %1461 = vmatprep.subr.mxu0 %v82
    %1462 = vmatpush1.msra.mxu0 %v81
    %1463 = vmatprep.subr.mxu0 %v78
    %1464 = vmatpush1.msra.mxu0 %v77
    %1465 = vmatprep.subr.mxu0 %v74
    %1466 = vmatpush1.msra.mxu0 %v73
    %1467 = vmatprep.subr.mxu0 %v70
    %1468 = vmatpush1.msra.mxu0 %v69
    %1469 = vmatprep.subr.mxu0 %v66
    %1470 = vmatpush1.msra.mxu0 %v65
    %1471 = vmatprep.subr.mxu0 %v62
    %1472 = vmatpush1.msra.mxu0 %v61
    %1473 = vmatprep.subr.mxu0 %v58
    %1474 = vmatpush1.msra.mxu0 %v57
    %1475 = vmatprep.subr.mxu0 %v54
    %1476 = vmatpush1.msra.mxu0 %v53
    %1477 = vmatprep.subr.mxu0 %v50
    %1478 = vmatpush1.msra.mxu0 %v49
    %1479 = vmatprep.subr.mxu0 %v46
    %1480 = vmatpush1.msra.mxu0 %v45
    %1481 = vmatprep.subr.mxu0 %v42
    %1482 = vmatpush1.msra.mxu0 %v41
    %1483 = vmatprep.subr.mxu0 0.0
    %1484 = vmatpush2.msra.mxu0 0.0
    %1485 = vmatprep.subr.mxu0 0.0
    %1486 = vmatpush2.msra.mxu0 0.0
    %1487 = vmatprep.subr.mxu0 0.0
    %1488 = vmatpush2.msra.mxu0 0.0
    %1489 = vmatprep.subr.mxu0 0.0
    %1490 = vmatpush2.msra.mxu0 0.0
    %1491 = vmatprep.subr.mxu0 0.0
    %1492 = vmatpush2.msra.mxu0 0.0
    %1493 = vmatprep.subr.mxu0 0.0
    %1494 = vmatpush2.msra.mxu0 0.0
    %1495 = vmatprep.subr.mxu0 0.0
    %1496 = vmatpush2.msra.mxu0 0.0
    %1497 = vmatprep.subr.mxu0 0.0
    %1498 = vmatpush2.msra.mxu0 0.0
    %1499 = vmatprep.subr.mxu0 0.0
    %1500 = vmatpush2.msra.mxu0 0.0
    %1501 = vmatprep.subr.mxu0 0.0
    %1502 = vmatpush2.msra.mxu0 0.0
    %1503 = vmatprep.subr.mxu0 0.0
    %1504 = vmatpush2.msra.mxu0 0.0
    %1505 = vmatprep.subr.mxu0 0.0
    %1506 = vmatpush2.msra.mxu0 0.0
    %1507 = vmatprep.subr.mxu0 0.0
    %1508 = vmatpush2.msra.mxu0 0.0
    %1509 = vmatprep.subr.mxu0 0.0
    %1510 = vmatpush2.msra.mxu0 0.0
    %1511 = vmatprep.subr.mxu0 0.0
    %1512 = vmatpush2.msra.mxu0 0.0
    %1513 = vmatprep.subr.mxu0 0.0
    %1514 = vmatpush2.msra.mxu0 0.0
    %1515 = vmatprep.mubr.f32.mxu0 0.0
    %1516 = vmatmul.mubr.f32.gmra.mxu0 %v1378
    %v1517 = vpop.f32.mrf.mxu0
    %v1518 = vadd.f32 0.0, %v1517
    %v1519 = vpop.f32.mrf.mxu0
    %v1520 = vadd.f32 0.0, %v1519
    %1521 = vdwg.mxu0
    %v1526 = vrot.slane %v1447, 3
    %v1527 = vrot.slane %v1449, 3
    %v1528 = vrot.slane %v1518, 3
    %v1529 = vrot.slane %v1520, 3
    %v1530 = vrot.slane %v1447, 4
    %v1531 = vrot.slane %v1449, 4
    %v1532 = vrot.slane %v1518, 4
    %v1533 = vrot.slane %v1520, 4
    %v1542 = vadd.f32 %v167, %v1526
    %v1543 = vadd.f32 %v168, %v1527
    %v1544 = vadd.f32 %v169, %v1528
    %v1545 = vadd.f32 %v170, %v1529
    %v1546 = vadd.f32 %v171, %v1530
    %v1547 = vadd.f32 %v172, %v1531
    %v1548 = vadd.f32 %v173, %v1532
    %v1549 = vadd.f32 %v174, %v1533
    %v1550 = vxor.u32 %v1542, 2147483648
    %v1551 = vxor.u32 %v1543, 2147483648
    %v1552 = vxor.u32 %v1544, 2147483648
    %v1553 = vxor.u32 %v1545, 2147483648
    %v1554 = vxor.u32 %v1546, 2147483648
    %v1555 = vxor.u32 %v1547, 2147483648
    %v1556 = vxor.u32 %v1548, 2147483648
    %v1557 = vxor.u32 %v1549, 2147483648
    %v1558 = vmul.f32 %v1550, 1.442695
    %v1559 = vpow.pop %v1558
    %v1560 = vmul.f32 %v1551, 1.442695
    %v1561 = vpow.pop %v1560
    %v1562 = vmul.f32 %v1552, 1.442695
    %v1563 = vpow.pop %v1562
    %v1564 = vmul.f32 %v1553, 1.442695
    %v1565 = vpow.pop %v1564
    %v1566 = vmul.f32 %v1554, 1.442695
    %v1567 = vpow.pop %v1566
    %v1568 = vmul.f32 %v1555, 1.442695
    %v1569 = vpow.pop %v1568
    %v1570 = vmul.f32 %v1556, 1.442695
    %v1571 = vpow.pop %v1570
    %v1572 = vmul.f32 %v1557, 1.442695
    %v1573 = vpow.pop %v1572
    %v1574 = vadd.f32 %v1559, 1.0
    %v1575 = vadd.f32 %v1561, 1.0
    %v1576 = vadd.f32 %v1563, 1.0
    %v1577 = vadd.f32 %v1565, 1.0
    %v1578 = vadd.f32 %v1567, 1.0
    %v1579 = vadd.f32 %v1569, 1.0
    %v1580 = vadd.f32 %v1571, 1.0
    %v1581 = vadd.f32 %v1573, 1.0
    %v1582 = vrcp.pop %v1574
    %v1583 = vmul.f32 1.0, %v1582
    %v1584 = vrcp.pop %v1575
    %v1585 = vmul.f32 1.0, %v1584
    %v1586 = vrcp.pop %v1576
    %v1587 = vmul.f32 1.0, %v1586
    %v1588 = vrcp.pop %v1577
    %v1589 = vmul.f32 1.0, %v1588
    %v1590 = vrcp.pop %v1578
    %v1591 = vmul.f32 1.0, %v1590
    %v1592 = vrcp.pop %v1579
    %v1593 = vmul.f32 1.0, %v1592
    %v1594 = vrcp.pop %v1580
    %v1595 = vmul.f32 1.0, %v1594
    %v1596 = vrcp.pop %v1581
    %v1597 = vmul.f32 1.0, %v1596
    %v1598 = vmul.f32 %v1587, 2.0
    %v1599 = vmul.f32 %v1595, 2.0
    %v1600 = vsub.f32 %v1598, 1.0
    %v1601 = vsub.f32 %v1599, 1.0
    %v1604 = vrot.slane %v1368, 7
    %v1605 = vrot.slane %v1369, 7
    %v1608 = vmul.f32 %v1585, %v1604
    %v1609 = vmul.f32 %v1593, %v1605
    %v1610 = vmul.f32 %v1583, %v1600
    %v1611 = vmul.f32 %v1591, %v1601
    %v1612 = vadd.f32 %v1608, %v1610
    %v1613 = vadd.f32 %v1609, %v1611
    %v1614 = vtanh.pop %v1612
    %v1615 = vtanh.pop %v1613
    %v1616 = vmul.f32 %v1589, %v1614
    %v1617 = vmul.f32 %v1597, %v1615
    %v1620 = vrot.slane %v1616, 5
    %v1621 = vrot.slane %v1617, 4
    %v1622 = vsel %vm406, %v1621, %v1620
    %1624 = vmatprep.subr.mxu0 %v100
    %1625 = vmatpush1.msra.mxu0 %v99
    %1626 = vmatprep.subr.mxu0 %v96
    %1627 = vmatpush1.msra.mxu0 %v95
    %1628 = vmatprep.subr.mxu0 %v92
    %1629 = vmatpush1.msra.mxu0 %v91
    %1630 = vmatprep.subr.mxu0 %v88
    %1631 = vmatpush1.msra.mxu0 %v87
    %1632 = vmatprep.subr.mxu0 %v84
    %1633 = vmatpush1.msra.mxu0 %v83
    %1634 = vmatprep.subr.mxu0 %v80
    %1635 = vmatpush1.msra.mxu0 %v79
    %1636 = vmatprep.subr.mxu0 %v76
    %1637 = vmatpush1.msra.mxu0 %v75
    %1638 = vmatprep.subr.mxu0 %v72
    %1639 = vmatpush1.msra.mxu0 %v71
    %1640 = vmatprep.subr.mxu0 %v68
    %1641 = vmatpush1.msra.mxu0 %v67
    %1642 = vmatprep.subr.mxu0 %v64
    %1643 = vmatpush1.msra.mxu0 %v63
    %1644 = vmatprep.subr.mxu0 %v60
    %1645 = vmatpush1.msra.mxu0 %v59
    %1646 = vmatprep.subr.mxu0 %v56
    %1647 = vmatpush1.msra.mxu0 %v55
    %1648 = vmatprep.subr.mxu0 %v52
    %1649 = vmatpush1.msra.mxu0 %v51
    %1650 = vmatprep.subr.mxu0 %v48
    %1651 = vmatpush1.msra.mxu0 %v47
    %1652 = vmatprep.subr.mxu0 %v44
    %1653 = vmatpush1.msra.mxu0 %v43
    %1654 = vmatprep.subr.mxu0 %v40
    %1655 = vmatpush1.msra.mxu0 %v39
    %1656 = vmatprep.subr.mxu0 0.0
    %1657 = vmatpush2.msra.mxu0 0.0
    %1658 = vmatprep.subr.mxu0 0.0
    %1659 = vmatpush2.msra.mxu0 0.0
    %1660 = vmatprep.subr.mxu0 0.0
    %1661 = vmatpush2.msra.mxu0 0.0
    %1662 = vmatprep.subr.mxu0 0.0
    %1663 = vmatpush2.msra.mxu0 0.0
    %1664 = vmatprep.subr.mxu0 0.0
    %1665 = vmatpush2.msra.mxu0 0.0
    %1666 = vmatprep.subr.mxu0 0.0
    %1667 = vmatpush2.msra.mxu0 0.0
    %1668 = vmatprep.subr.mxu0 0.0
    %1669 = vmatpush2.msra.mxu0 0.0
    %1670 = vmatprep.subr.mxu0 0.0
    %1671 = vmatpush2.msra.mxu0 0.0
    %1672 = vmatprep.subr.mxu0 0.0
    %1673 = vmatpush2.msra.mxu0 0.0
    %1674 = vmatprep.subr.mxu0 0.0
    %1675 = vmatpush2.msra.mxu0 0.0
    %1676 = vmatprep.subr.mxu0 0.0
    %1677 = vmatpush2.msra.mxu0 0.0
    %1678 = vmatprep.subr.mxu0 0.0
    %1679 = vmatpush2.msra.mxu0 0.0
    %1680 = vmatprep.subr.mxu0 0.0
    %1681 = vmatpush2.msra.mxu0 0.0
    %1682 = vmatprep.subr.mxu0 0.0
    %1683 = vmatpush2.msra.mxu0 0.0
    %1684 = vmatprep.subr.mxu0 0.0
    %1685 = vmatpush2.msra.mxu0 0.0
    %1686 = vmatprep.subr.mxu0 0.0
    %1687 = vmatpush2.msra.mxu0 0.0
    %1688 = vmatprep.mubr.f32.mxu0 0.0
    %1689 = vmatmul.mubr.f32.gmra.mxu0 %v1622
    %v1690 = vpop.f32.mrf.mxu0
    %v1691 = vadd.f32 0.0, %v1690
    %v1692 = vpop.f32.mrf.mxu0
    %v1693 = vadd.f32 0.0, %v1692
    %1694 = vdwg.mxu0
    %1695 = vmatprep.subr.mxu0 %v102
    %1696 = vmatpush1.msra.mxu0 %v101
    %1697 = vmatprep.subr.mxu0 %v98
    %1698 = vmatpush1.msra.mxu0 %v97
    %1699 = vmatprep.subr.mxu0 %v94
    %1700 = vmatpush1.msra.mxu0 %v93
    %1701 = vmatprep.subr.mxu0 %v90
    %1702 = vmatpush1.msra.mxu0 %v89
    %1703 = vmatprep.subr.mxu0 %v86
    %1704 = vmatpush1.msra.mxu0 %v85
    %1705 = vmatprep.subr.mxu0 %v82
    %1706 = vmatpush1.msra.mxu0 %v81
    %1707 = vmatprep.subr.mxu0 %v78
    %1708 = vmatpush1.msra.mxu0 %v77
    %1709 = vmatprep.subr.mxu0 %v74
    %1710 = vmatpush1.msra.mxu0 %v73
    %1711 = vmatprep.subr.mxu0 %v70
    %1712 = vmatpush1.msra.mxu0 %v69
    %1713 = vmatprep.subr.mxu0 %v66
    %1714 = vmatpush1.msra.mxu0 %v65
    %1715 = vmatprep.subr.mxu0 %v62
    %1716 = vmatpush1.msra.mxu0 %v61
    %1717 = vmatprep.subr.mxu0 %v58
    %1718 = vmatpush1.msra.mxu0 %v57
    %1719 = vmatprep.subr.mxu0 %v54
    %1720 = vmatpush1.msra.mxu0 %v53
    %1721 = vmatprep.subr.mxu0 %v50
    %1722 = vmatpush1.msra.mxu0 %v49
    %1723 = vmatprep.subr.mxu0 %v46
    %1724 = vmatpush1.msra.mxu0 %v45
    %1725 = vmatprep.subr.mxu0 %v42
    %1726 = vmatpush1.msra.mxu0 %v41
    %1727 = vmatprep.subr.mxu0 0.0
    %1728 = vmatpush2.msra.mxu0 0.0
    %1729 = vmatprep.subr.mxu0 0.0
    %1730 = vmatpush2.msra.mxu0 0.0
    %1731 = vmatprep.subr.mxu0 0.0
    %1732 = vmatpush2.msra.mxu0 0.0
    %1733 = vmatprep.subr.mxu0 0.0
    %1734 = vmatpush2.msra.mxu0 0.0
    %1735 = vmatprep.subr.mxu0 0.0
    %1736 = vmatpush2.msra.mxu0 0.0
    %1737 = vmatprep.subr.mxu0 0.0
    %1738 = vmatpush2.msra.mxu0 0.0
    %1739 = vmatprep.subr.mxu0 0.0
    %1740 = vmatpush2.msra.mxu0 0.0
    %1741 = vmatprep.subr.mxu0 0.0
    %1742 = vmatpush2.msra.mxu0 0.0
    %1743 = vmatprep.subr.mxu0 0.0
    %1744 = vmatpush2.msra.mxu0 0.0
    %1745 = vmatprep.subr.mxu0 0.0
    %1746 = vmatpush2.msra.mxu0 0.0
    %1747 = vmatprep.subr.mxu0 0.0
    %1748 = vmatpush2.msra.mxu0 0.0
    %1749 = vmatprep.subr.mxu0 0.0
    %1750 = vmatpush2.msra.mxu0 0.0
    %1751 = vmatprep.subr.mxu0 0.0
    %1752 = vmatpush2.msra.mxu0 0.0
    %1753 = vmatprep.subr.mxu0 0.0
    %1754 = vmatpush2.msra.mxu0 0.0
    %1755 = vmatprep.subr.mxu0 0.0
    %1756 = vmatpush2.msra.mxu0 0.0
    %1757 = vmatprep.subr.mxu0 0.0
    %1758 = vmatpush2.msra.mxu0 0.0
    %1759 = vmatprep.mubr.f32.mxu0 0.0
    %1760 = vmatmul.mubr.f32.gmra.mxu0 %v1622
    %v1761 = vpop.f32.mrf.mxu0
    %v1762 = vadd.f32 0.0, %v1761
    %v1763 = vpop.f32.mrf.mxu0
    %v1764 = vadd.f32 0.0, %v1763
    %1765 = vdwg.mxu0
    %v1770 = vrot.slane %v1691, 2
    %v1771 = vrot.slane %v1693, 2
    %v1772 = vrot.slane %v1762, 2
    %v1773 = vrot.slane %v1764, 2
    %v1774 = vrot.slane %v1691, 3
    %v1775 = vrot.slane %v1693, 3
    %v1776 = vrot.slane %v1762, 3
    %v1777 = vrot.slane %v1764, 3
    %v1786 = vadd.f32 %v167, %v1770
    %v1787 = vadd.f32 %v168, %v1771
    %v1788 = vadd.f32 %v169, %v1772
    %v1789 = vadd.f32 %v170, %v1773
    %v1790 = vadd.f32 %v171, %v1774
    %v1791 = vadd.f32 %v172, %v1775
    %v1792 = vadd.f32 %v173, %v1776
    %v1793 = vadd.f32 %v174, %v1777
    %v1794 = vxor.u32 %v1786, 2147483648
    %v1795 = vxor.u32 %v1787, 2147483648
    %v1796 = vxor.u32 %v1788, 2147483648
    %v1797 = vxor.u32 %v1789, 2147483648
    %v1798 = vxor.u32 %v1790, 2147483648
    %v1799 = vxor.u32 %v1791, 2147483648
    %v1800 = vxor.u32 %v1792, 2147483648
    %v1801 = vxor.u32 %v1793, 2147483648
    %v1802 = vmul.f32 %v1794, 1.442695
    %v1803 = vpow.pop %v1802
    %v1804 = vmul.f32 %v1795, 1.442695
    %v1805 = vpow.pop %v1804
    %v1806 = vmul.f32 %v1796, 1.442695
    %v1807 = vpow.pop %v1806
    %v1808 = vmul.f32 %v1797, 1.442695
    %v1809 = vpow.pop %v1808
    %v1810 = vmul.f32 %v1798, 1.442695
    %v1811 = vpow.pop %v1810
    %v1812 = vmul.f32 %v1799, 1.442695
    %v1813 = vpow.pop %v1812
    %v1814 = vmul.f32 %v1800, 1.442695
    %v1815 = vpow.pop %v1814
    %v1816 = vmul.f32 %v1801, 1.442695
    %v1817 = vpow.pop %v1816
    %v1818 = vadd.f32 %v1803, 1.0
    %v1819 = vadd.f32 %v1805, 1.0
    %v1820 = vadd.f32 %v1807, 1.0
    %v1821 = vadd.f32 %v1809, 1.0
    %v1822 = vadd.f32 %v1811, 1.0
    %v1823 = vadd.f32 %v1813, 1.0
    %v1824 = vadd.f32 %v1815, 1.0
    %v1825 = vadd.f32 %v1817, 1.0
    %v1826 = vrcp.pop %v1818
    %v1827 = vmul.f32 1.0, %v1826
    %v1828 = vrcp.pop %v1819
    %v1829 = vmul.f32 1.0, %v1828
    %v1830 = vrcp.pop %v1820
    %v1831 = vmul.f32 1.0, %v1830
    %v1832 = vrcp.pop %v1821
    %v1833 = vmul.f32 1.0, %v1832
    %v1834 = vrcp.pop %v1822
    %v1835 = vmul.f32 1.0, %v1834
    %v1836 = vrcp.pop %v1823
    %v1837 = vmul.f32 1.0, %v1836
    %v1838 = vrcp.pop %v1824
    %v1839 = vmul.f32 1.0, %v1838
    %v1840 = vrcp.pop %v1825
    %v1841 = vmul.f32 1.0, %v1840
    %v1842 = vmul.f32 %v1831, 2.0
    %v1843 = vmul.f32 %v1839, 2.0
    %v1844 = vsub.f32 %v1842, 1.0
    %v1845 = vsub.f32 %v1843, 1.0
    %v1848 = vrot.slane %v1612, 7
    %v1849 = vrot.slane %v1613, 7
    %v1852 = vmul.f32 %v1829, %v1848
    %v1853 = vmul.f32 %v1837, %v1849
    %v1854 = vmul.f32 %v1827, %v1844
    %v1855 = vmul.f32 %v1835, %v1845
    %v1856 = vadd.f32 %v1852, %v1854
    %v1857 = vadd.f32 %v1853, %v1855
    %v1858 = vtanh.pop %v1856
    %v1859 = vtanh.pop %v1857
    %v1860 = vmul.f32 %v1833, %v1858
    %v1861 = vmul.f32 %v1841, %v1859
    %v1864 = vrot.slane %v1860, 6
    %v1865 = vrot.slane %v1861, 5
    %v1866 = vsel %vm406, %v1865, %v1864
    %1868 = vmatprep.subr.mxu0 %v100
    %1869 = vmatpush1.msra.mxu0 %v99
    %1870 = vmatprep.subr.mxu0 %v96
    %1871 = vmatpush1.msra.mxu0 %v95
    %1872 = vmatprep.subr.mxu0 %v92
    %1873 = vmatpush1.msra.mxu0 %v91
    %1874 = vmatprep.subr.mxu0 %v88
    %1875 = vmatpush1.msra.mxu0 %v87
    %1876 = vmatprep.subr.mxu0 %v84
    %1877 = vmatpush1.msra.mxu0 %v83
    %1878 = vmatprep.subr.mxu0 %v80
    %1879 = vmatpush1.msra.mxu0 %v79
    %1880 = vmatprep.subr.mxu0 %v76
    %1881 = vmatpush1.msra.mxu0 %v75
    %1882 = vmatprep.subr.mxu0 %v72
    %1883 = vmatpush1.msra.mxu0 %v71
    %1884 = vmatprep.subr.mxu0 %v68
    %1885 = vmatpush1.msra.mxu0 %v67
    %1886 = vmatprep.subr.mxu0 %v64
    %1887 = vmatpush1.msra.mxu0 %v63
    %1888 = vmatprep.subr.mxu0 %v60
    %1889 = vmatpush1.msra.mxu0 %v59
    %1890 = vmatprep.subr.mxu0 %v56
    %1891 = vmatpush1.msra.mxu0 %v55
    %1892 = vmatprep.subr.mxu0 %v52
    %1893 = vmatpush1.msra.mxu0 %v51
    %1894 = vmatprep.subr.mxu0 %v48
    %1895 = vmatpush1.msra.mxu0 %v47
    %1896 = vmatprep.subr.mxu0 %v44
    %1897 = vmatpush1.msra.mxu0 %v43
    %1898 = vmatprep.subr.mxu0 %v40
    %1899 = vmatpush1.msra.mxu0 %v39
    %1900 = vmatprep.subr.mxu0 0.0
    %1901 = vmatpush2.msra.mxu0 0.0
    %1902 = vmatprep.subr.mxu0 0.0
    %1903 = vmatpush2.msra.mxu0 0.0
    %1904 = vmatprep.subr.mxu0 0.0
    %1905 = vmatpush2.msra.mxu0 0.0
    %1906 = vmatprep.subr.mxu0 0.0
    %1907 = vmatpush2.msra.mxu0 0.0
    %1908 = vmatprep.subr.mxu0 0.0
    %1909 = vmatpush2.msra.mxu0 0.0
    %1910 = vmatprep.subr.mxu0 0.0
    %1911 = vmatpush2.msra.mxu0 0.0
    %1912 = vmatprep.subr.mxu0 0.0
    %1913 = vmatpush2.msra.mxu0 0.0
    %1914 = vmatprep.subr.mxu0 0.0
    %1915 = vmatpush2.msra.mxu0 0.0
    %1916 = vmatprep.subr.mxu0 0.0
    %1917 = vmatpush2.msra.mxu0 0.0
    %1918 = vmatprep.subr.mxu0 0.0
    %1919 = vmatpush2.msra.mxu0 0.0
    %1920 = vmatprep.subr.mxu0 0.0
    %1921 = vmatpush2.msra.mxu0 0.0
    %1922 = vmatprep.subr.mxu0 0.0
    %1923 = vmatpush2.msra.mxu0 0.0
    %1924 = vmatprep.subr.mxu0 0.0
    %1925 = vmatpush2.msra.mxu0 0.0
    %1926 = vmatprep.subr.mxu0 0.0
    %1927 = vmatpush2.msra.mxu0 0.0
    %1928 = vmatprep.subr.mxu0 0.0
    %1929 = vmatpush2.msra.mxu0 0.0
    %1930 = vmatprep.subr.mxu0 0.0
    %1931 = vmatpush2.msra.mxu0 0.0
    %1932 = vmatprep.mubr.f32.mxu0 0.0
    %1933 = vmatmul.mubr.f32.gmra.mxu0 %v1866
    %v1934 = vpop.f32.mrf.mxu0
    %v1935 = vadd.f32 0.0, %v1934
    %v1936 = vpop.f32.mrf.mxu0
    %v1937 = vadd.f32 0.0, %v1936
    %1938 = vdwg.mxu0
    %1939 = vmatprep.subr.mxu0 %v102
    %1940 = vmatpush1.msra.mxu0 %v101
    %1941 = vmatprep.subr.mxu0 %v98
    %1942 = vmatpush1.msra.mxu0 %v97
    %1943 = vmatprep.subr.mxu0 %v94
    %1944 = vmatpush1.msra.mxu0 %v93
    %1945 = vmatprep.subr.mxu0 %v90
    %1946 = vmatpush1.msra.mxu0 %v89
    %1947 = vmatprep.subr.mxu0 %v86
    %1948 = vmatpush1.msra.mxu0 %v85
    %1949 = vmatprep.subr.mxu0 %v82
    %1950 = vmatpush1.msra.mxu0 %v81
    %1951 = vmatprep.subr.mxu0 %v78
    %1952 = vmatpush1.msra.mxu0 %v77
    %1953 = vmatprep.subr.mxu0 %v74
    %1954 = vmatpush1.msra.mxu0 %v73
    %1955 = vmatprep.subr.mxu0 %v70
    %1956 = vmatpush1.msra.mxu0 %v69
    %1957 = vmatprep.subr.mxu0 %v66
    %1958 = vmatpush1.msra.mxu0 %v65
    %1959 = vmatprep.subr.mxu0 %v62
    %1960 = vmatpush1.msra.mxu0 %v61
    %1961 = vmatprep.subr.mxu0 %v58
    %1962 = vmatpush1.msra.mxu0 %v57
    %1963 = vmatprep.subr.mxu0 %v54
    %1964 = vmatpush1.msra.mxu0 %v53
    %1965 = vmatprep.subr.mxu0 %v50
    %1966 = vmatpush1.msra.mxu0 %v49
    %1967 = vmatprep.subr.mxu0 %v46
    %1968 = vmatpush1.msra.mxu0 %v45
    %1969 = vmatprep.subr.mxu0 %v42
    %1970 = vmatpush1.msra.mxu0 %v41
    %1971 = vmatprep.subr.mxu0 0.0
    %1972 = vmatpush2.msra.mxu0 0.0
    %1973 = vmatprep.subr.mxu0 0.0
    %1974 = vmatpush2.msra.mxu0 0.0
    %1975 = vmatprep.subr.mxu0 0.0
    %1976 = vmatpush2.msra.mxu0 0.0
    %1977 = vmatprep.subr.mxu0 0.0
    %1978 = vmatpush2.msra.mxu0 0.0
    %1979 = vmatprep.subr.mxu0 0.0
    %1980 = vmatpush2.msra.mxu0 0.0
    %1981 = vmatprep.subr.mxu0 0.0
    %1982 = vmatpush2.msra.mxu0 0.0
    %1983 = vmatprep.subr.mxu0 0.0
    %1984 = vmatpush2.msra.mxu0 0.0
    %1985 = vmatprep.subr.mxu0 0.0
    %1986 = vmatpush2.msra.mxu0 0.0
    %1987 = vmatprep.subr.mxu0 0.0
    %1988 = vmatpush2.msra.mxu0 0.0
    %1989 = vmatprep.subr.mxu0 0.0
    %1990 = vmatpush2.msra.mxu0 0.0
    %1991 = vmatprep.subr.mxu0 0.0
    %1992 = vmatpush2.msra.mxu0 0.0
    %1993 = vmatprep.subr.mxu0 0.0
    %1994 = vmatpush2.msra.mxu0 0.0
    %1995 = vmatprep.subr.mxu0 0.0
    %1996 = vmatpush2.msra.mxu0 0.0
    %1997 = vmatprep.subr.mxu0 0.0
    %1998 = vmatpush2.msra.mxu0 0.0
    %1999 = vmatprep.subr.mxu0 0.0
    %2000 = vmatpush2.msra.mxu0 0.0
    %2001 = vmatprep.subr.mxu0 0.0
    %2002 = vmatpush2.msra.mxu0 0.0
    %2003 = vmatprep.mubr.f32.mxu0 0.0
    %2004 = vmatmul.mubr.f32.gmra.mxu0 %v1866
    %v2005 = vpop.f32.mrf.mxu0
    %v2006 = vadd.f32 0.0, %v2005
    %v2007 = vpop.f32.mrf.mxu0
    %v2008 = vadd.f32 0.0, %v2007
    %2009 = vdwg.mxu0
    %v2014 = vrot.slane %v1935, 1
    %v2015 = vrot.slane %v1937, 1
    %v2016 = vrot.slane %v2006, 1
    %v2017 = vrot.slane %v2008, 1
    %v2018 = vrot.slane %v1935, 2
    %v2019 = vrot.slane %v1937, 2
    %v2020 = vrot.slane %v2006, 2
    %v2021 = vrot.slane %v2008, 2
    %v2030 = vadd.f32 %v167, %v2014
    %v2031 = vadd.f32 %v168, %v2015
    %v2032 = vadd.f32 %v169, %v2016
    %v2033 = vadd.f32 %v170, %v2017
    %v2034 = vadd.f32 %v171, %v2018
    %v2035 = vadd.f32 %v172, %v2019
    %v2036 = vadd.f32 %v173, %v2020
    %v2037 = vadd.f32 %v174, %v2021
    %v2038 = vxor.u32 %v2030, 2147483648
    %v2039 = vxor.u32 %v2031, 2147483648
    %v2040 = vxor.u32 %v2032, 2147483648
    %v2041 = vxor.u32 %v2033, 2147483648
    %v2042 = vxor.u32 %v2034, 2147483648
    %v2043 = vxor.u32 %v2035, 2147483648
    %v2044 = vxor.u32 %v2036, 2147483648
    %v2045 = vxor.u32 %v2037, 2147483648
    %v2046 = vmul.f32 %v2038, 1.442695
    %v2047 = vpow.pop %v2046
    %v2048 = vmul.f32 %v2039, 1.442695
    %v2049 = vpow.pop %v2048
    %v2050 = vmul.f32 %v2040, 1.442695
    %v2051 = vpow.pop %v2050
    %v2052 = vmul.f32 %v2041, 1.442695
    %v2053 = vpow.pop %v2052
    %v2054 = vmul.f32 %v2042, 1.442695
    %v2055 = vpow.pop %v2054
    %v2056 = vmul.f32 %v2043, 1.442695
    %v2057 = vpow.pop %v2056
    %v2058 = vmul.f32 %v2044, 1.442695
    %v2059 = vpow.pop %v2058
    %v2060 = vmul.f32 %v2045, 1.442695
    %v2061 = vpow.pop %v2060
    %v2062 = vadd.f32 %v2047, 1.0
    %v2063 = vadd.f32 %v2049, 1.0
    %v2064 = vadd.f32 %v2051, 1.0
    %v2065 = vadd.f32 %v2053, 1.0
    %v2066 = vadd.f32 %v2055, 1.0
    %v2067 = vadd.f32 %v2057, 1.0
    %v2068 = vadd.f32 %v2059, 1.0
    %v2069 = vadd.f32 %v2061, 1.0
    %v2070 = vrcp.pop %v2062
    %v2071 = vmul.f32 1.0, %v2070
    %v2072 = vrcp.pop %v2063
    %v2073 = vmul.f32 1.0, %v2072
    %v2074 = vrcp.pop %v2064
    %v2075 = vmul.f32 1.0, %v2074
    %v2076 = vrcp.pop %v2065
    %v2077 = vmul.f32 1.0, %v2076
    %v2078 = vrcp.pop %v2066
    %v2079 = vmul.f32 1.0, %v2078
    %v2080 = vrcp.pop %v2067
    %v2081 = vmul.f32 1.0, %v2080
    %v2082 = vrcp.pop %v2068
    %v2083 = vmul.f32 1.0, %v2082
    %v2084 = vrcp.pop %v2069
    %v2085 = vmul.f32 1.0, %v2084
    %v2086 = vmul.f32 %v2075, 2.0
    %v2087 = vmul.f32 %v2083, 2.0
    %v2088 = vsub.f32 %v2086, 1.0
    %v2089 = vsub.f32 %v2087, 1.0
    %v2092 = vrot.slane %v1856, 7
    %v2093 = vrot.slane %v1857, 7
    %v2096 = vmul.f32 %v2073, %v2092
    %v2097 = vmul.f32 %v2081, %v2093
    %v2098 = vmul.f32 %v2071, %v2088
    %v2099 = vmul.f32 %v2079, %v2089
    %v2100 = vadd.f32 %v2096, %v2098
    %v2101 = vadd.f32 %v2097, %v2099
    %v2102 = vtanh.pop %v2100
    %v2103 = vtanh.pop %v2101
    %v2104 = vmul.f32 %v2077, %v2102
    %v2105 = vmul.f32 %v2085, %v2103
    %v2106 = vld [vmem:[%s4] sm:$0x1]
    %v2108 = vlaneseq
    %v2109 = vshrl.u32 %v2108, 7
    %v2110 = vsub.s32 0, %v2109
    %v2111 = vrot.slane %v2106, %v2110
    %v2113 = vmul.f32 %v2104, %v2111
    %v2114 = vmul.f32 %v2105, %v2111
    %v2117 = vrot.slane %v2114, 7
    %vm2120 = vcmask 1047559
    %v2121 = vsel %vm2120, %v2113, 0.0
    %2122 = vadd.xlane.f32.xlu0 %v2121
    %v2123 = vpop.xlane.xlu0 %2122
    %vm2124 = vcmask 1040384
    %v2125 = vsel %vm2124, %v2117, 0.0
    %2126 = vadd.xlane.f32.xlu0 %v2125
    %v2127 = vpop.xlane.xlu0 %2126
    %v2128 = vld [vmem:[#allocation2] sm:$0x1]
    %v2130 = vlaneseq
    %v2131 = vshrl.u32 %v2130, 7
    %v2132 = vsub.s32 0, %v2131
    %v2133 = vrot.slane %v2128, %v2132
    %v2135 = vadd.f32 %v2123, %v2133
    %v2136 = vadd.f32 %v2127, %v2133
    %vm2137 = vcmask 7175
    %2138 = vst.msk [vmem:[%s6 - $0x7] sm:$0x80] %vm2137, %v2135
    %vm2139 = vcmask 0
    %2140 = vst.msk [vmem:[%s6 + $0x1] sm:$0x1] %vm2139, %v2136
    // Predicated region
    $region30: #{lstm_model_forward.1} parent=1 // pred_check
      _
    $region31: #{lstm_model_forward.1} parent=1 // pred_check_branch
      %2142 = sbr.rel (0) target = $region33
    $region32: #{lstm_model_forward.1} parent=1 // pred_region
      _
    $region33: #{lstm_model_forward.1} parent=1 // pred_fallthru
      _
    // Predicated region
    $region34: #{lstm_model_forward.1} parent=1 // pred_check
      _
    $region35: #{lstm_model_forward.1} parent=1 // pred_check_branch
      %2144 = sbr.rel (0) target = $region37
    $region36: #{lstm_model_forward.1} parent=1 // pred_region
      _
    $region37: #{lstm_model_forward.1} parent=1 // pred_fallthru
      _
    %2145 = vsyncpa [#allocation4], 1

</llo_original>
